<compile_context>
chip_gen: v6e
topology: v6e:2x2x1
jax: 0.10.0
libtpu: 0.0.40
codegen_flags: <defaults>
</compile_context>

<pallas_src>
import math
import functools

import jax
import jax.numpy as jnp
from jax.experimental import pallas as pl
from jax.experimental.pallas import tpu as pltpu

LANE = 128        # TPU lane width: pad d_model / per-head width to 128 lanes
NEG_INF = -1e30   # finite "masked" value (avoids -inf - (-inf) = NaN hazards)


def encoder_kernel(ids_ref, emb_ref, pe_ref, wqkv_ref, bqkv_ref, wo_ref, bo_ref,
                   out_ref, x_buf, gather_sems, *, num_heads, d_model, causal):
    S, DP = out_ref.shape
    H = num_heads
    dk = d_model // H
    hd = wo_ref.shape[1]          # per-head lane-tile width (dk rounded up to 128)
    cdt = wqkv_ref.dtype          # MXU compute dtype (bf16; fp32-accumulated)

    # --- embedding gather: token ids live in SMEM, table lives in HBM (ANY).
    #     All S row-DMAs are issued before any wait, landing directly in the
    #     VMEM x buffer (no store/reload pass over x).
    # TODO(synk): for large S, bound the in-flight window (e.g. 8 outstanding
    #             copies) instead of S semaphores.
    for i in range(S):
        pltpu.make_async_copy(emb_ref.at[pl.ds(ids_ref[i], 1), :],
                              x_buf.at[pl.ds(i, 1), :],
                              gather_sems.at[i]).start()
    for i in range(S):
        pltpu.make_async_copy(emb_ref.at[pl.ds(0, 1), :],       # same shape -> same byte count
                              x_buf.at[pl.ds(i, 1), :],
                              gather_sems.at[i]).wait()

    # --- sqrt(d_model) already folded into the table; just add precomputed PE.
    # TODO(synk): dropout on PE / attention weights treated as identity (eval mode).
    x = (x_buf[...] + pe_ref[...]).astype(cdt)

    # --- fused Q/K/V projection: one full-width (S,DP) x (DP, 3*H*hd) MXU matmul.
    qkv = jnp.dot(x, wqkv_ref[...], preferred_element_type=jnp.float32) + bqkv_ref[...]

    # --- additive causal mask generated in-kernel (no (S,S) HBM input).
    if causal:
        row = jax.lax.broadcasted_iota(jnp.int32, (S, S), 0)
        col = jax.lax.broadcasted_iota(jnp.int32, (S, S), 1)
        add_mask = jnp.where(col > row, jnp.float32(NEG_INF), jnp.float32(0.0))
    else:
        add_mask = jnp.zeros((S, S), jnp.float32)

    inv_sqrt_dk = jnp.float32(1.0 / math.sqrt(dk))
    out_acc = jnp.zeros((S, DP), jnp.float32)

    # --- per-head attention; every head slice is a 128-lane-tile-aligned slice
    #     (no relayouts); W_o accumulated inside the loop (no concatenate).
    for h in range(H):
        qh = qkv[:, h * hd:(h + 1) * hd].astype(cdt)
        kh = qkv[:, (H + h) * hd:(H + h + 1) * hd].astype(cdt)
        vh = qkv[:, (2 * H + h) * hd:(2 * H + h + 1) * hd].astype(cdt)
        # scores = qh @ kh.T (contract last dims; zero-padded lanes contribute 0)
        scores = jax.lax.dot_general(qh, kh, (((1,), (1,)), ((), ())),
                                     preferred_element_type=jnp.float32)
        scores = scores * inv_sqrt_dk + add_mask
        m = jnp.max(scores, axis=-1, keepdims=True)
        e = jnp.exp(scores - m)                       # softmax kept in f32 (v5e: no bf16 EUP)
        w = e * pl.reciprocal(jnp.sum(e, axis=-1, keepdims=True), approx=True)
        head_out = jnp.dot(w.astype(cdt), vh, preferred_element_type=jnp.float32)
        out_acc = out_acc + jnp.dot(head_out.astype(cdt), wo_ref[h],
                                    preferred_element_type=jnp.float32)

    out_ref[...] = out_acc + bo_ref[...]              # lane-dense (S, 128) store


def prepare_params(params, d_model, num_heads, max_seq_len,
                   compute_dtype=jnp.bfloat16):
    """One-time packing: HBM embedding table (sqrt(D) folded in), head-major
    lane-tile-aligned fused QKV, per-head W_o blocks, precomputed PE.
    # TODO(synk): on v7x consider fp8 weight storage to further halve VMEM."""
    D, DP, H = d_model, LANE, num_heads
    dk = D // H
    hd = ((dk + LANE - 1) // LANE) * LANE             # per-head lane-tile width
    V = params["embedding"].shape[0]

    # 2D HBM table (no VMEM tile padding); InputEmbedding's sqrt(d_model) folded in.
    emb = jnp.zeros((V, DP), jnp.float32).at[:, :D].set(
        params["embedding"] * jnp.float32(math.sqrt(D)))

    # fused QKV: head h's Q on lanes [h*hd, h*hd+dk), K at (H+h)*hd, V at (2H+h)*hd.
    wqkv = jnp.zeros((DP, 3 * H * hd), jnp.float32)
    bqkv = jnp.zeros((1, 3 * H * hd), jnp.float32)
    for t, (w, b) in enumerate([(params["wq_t"], params["bq"]),
                                (params["wk_t"], params["bk"]),
                                (params["wv_t"], params["bv"])]):
        for h in range(H):
            off = (t * H + h) * hd
            wqkv = wqkv.at[:D, off:off + dk].set(w[:, h * dk:(h + 1) * dk])
            bqkv = bqkv.at[:, off:off + dk].set(b[:, h * dk:(h + 1) * dk])

    # per-head W_o blocks (H, hd, DP); rows beyond dk are zero.
    wo = jnp.zeros((H, hd, DP), jnp.float32)
    for h in range(H):
        wo = wo.at[h, :dk, :D].set(params["wo_t"][h * dk:(h + 1) * dk, :])
    bo = jnp.zeros((1, DP), jnp.float32).at[:, :D].set(params["bo"])

    # Static sinusoidal PE (module's exact formula), precomputed once, lane-padded.
    pos = jnp.arange(max_seq_len, dtype=jnp.float32)[:, None]
    dim = jnp.arange(D, dtype=jnp.float32)[None, :]
    angle = pos * jnp.exp(-2.0 * dim * jnp.log(jnp.float32(10000.0)) / jnp.float32(D))
    pe = jnp.where((jnp.arange(D)[None, :] % 2) == 0, jnp.sin(angle), jnp.cos(angle))
    pe_p = jnp.zeros((max_seq_len, DP), jnp.float32).at[:, :D].set(pe)

    return {"emb": emb,
            "wqkv": wqkv.astype(compute_dtype), "bqkv": bqkv,
            "wo": wo.astype(compute_dtype), "bo": bo,
            "pe": pe_p}


def encoder_forward(token_ids, packed, *, d_model, num_heads, causal):
    assert d_model % num_heads == 0, (d_model, num_heads)
    S = token_ids.shape[0]
    DP = LANE
    pe = packed["pe"][:S]                              # precomputed; no-op slice when S == max

    kernel = functools.partial(encoder_kernel, num_heads=num_heads,
                               d_model=d_model, causal=causal)
    vmem = pl.BlockSpec(memory_space=pltpu.MemorySpace.VMEM)
    smem = pl.BlockSpec(memory_space=pltpu.MemorySpace.SMEM)
    hbm = pl.BlockSpec(memory_space=pl.ANY)            # embedding table stays in HBM

    out = pl.pallas_call(
        kernel,
        out_shape=jax.ShapeDtypeStruct((S, DP), jnp.float32),
        in_specs=[smem, hbm, vmem, vmem, vmem, vmem, vmem],
        out_specs=vmem,
        scratch_shapes=[pltpu.VMEM((S, DP), jnp.float32),      # DMA gather landing buffer
                        pltpu.SemaphoreType.DMA((S,))],
        compiler_params=pltpu.CompilerParams(vmem_limit_bytes=32 * 1024 * 1024),
    )(token_ids.astype(jnp.int32), packed["emb"], pe,
      packed["wqkv"], packed["bqkv"], packed["wo"], packed["bo"])
    # TODO(synk): at realistic d_model/S add a BlockSpec grid (N tiles 256 on
    #             v6e/v7x, 128 on v5e; K as trailing "arbitrary" axis with a
    #             pl.when-initialized f32 accumulator) and at least one
    #             "parallel" axis over S-tiles/batch for v7x's 2 TensorCores.
    return out[None, :, :d_model]                      # (1, S, D) like the PyTorch module


def ref_forward(token_ids, params, *, num_heads, causal):
    """Pure-JAX f32 reference replicating the PyTorch module math exactly."""
    emb = params["embedding"][token_ids]
    S, D = emb.shape
    dk = D // num_heads
    x = emb * math.sqrt(D)
    pos = jnp.arange(S, dtype=jnp.float32)[:, None]
    dim = jnp.arange(D, dtype=jnp.float32)[None, :]
    angle = pos * jnp.exp(-2.0 * dim * jnp.log(jnp.float32(10000.0)) / D)
    pe = jnp.where((jnp.arange(D)[None, :] % 2) == 0, jnp.sin(angle), jnp.cos(angle))
    x = x + pe
    q = x @ params["wq_t"] + params["bq"][0]
    k = x @ params["wk_t"] + params["bk"][0]
    v = x @ params["wv_t"] + params["bv"][0]
    qh = q.reshape(S, num_heads, dk).transpose(1, 0, 2)
    kh = k.reshape(S, num_heads, dk).transpose(1, 0, 2)
    vh = v.reshape(S, num_heads, dk).transpose(1, 0, 2)
    scores = jnp.einsum("hqd,hkd->hqk", qh, kh) / math.sqrt(dk)
    if causal:
        cmask = jnp.triu(jnp.ones((S, S), dtype=bool), k=1)
        scores = jnp.where(cmask[None], -jnp.inf, scores)
    w = jax.nn.softmax(scores, axis=-1)
    o = jnp.einsum("hqk,hkd->hqd", w, vh).transpose(1, 0, 2).reshape(S, D)
    return (o @ params["wo_t"] + params["bo"][0])[None]


def init_params(key, vocab_size, d_model):
    ks = jax.random.split(key, 9)
    scale = 0.1
    return {
        "embedding": jax.random.normal(ks[0], (vocab_size, d_model), jnp.float32) * scale,
        # W_*_t stored transposed (in_features, out_features) so x @ W_t == Linear(x)
        "wq_t": jax.random.normal(ks[1], (d_model, d_model), jnp.float32) * scale,
        "wk_t": jax.random.normal(ks[2], (d_model, d_model), jnp.float32) * scale,
        "wv_t": jax.random.normal(ks[3], (d_model, d_model), jnp.float32) * scale,
        "wo_t": jax.random.normal(ks[4], (d_model, d_model), jnp.float32) * scale,
        "bq": jax.random.normal(ks[5], (1, d_model), jnp.float32) * scale,
        "bk": jax.random.normal(ks[6], (1, d_model), jnp.float32) * scale,
        "bv": jax.random.normal(ks[7], (1, d_model), jnp.float32) * scale,
        "bo": jax.random.normal(ks[8], (1, d_model), jnp.float32) * scale,
    }


if __name__ == "__main__":
    # config analogue: {'d_model': 32, 'num_heads': 4, 'dropout': 0.1, 'causal_masking': True}
    d_model = 32
    num_heads = 4
    seq_len = 8
    vocab_size = 64
    causal = True

    key = jax.random.PRNGKey(0)
    k_tok, k_par = jax.random.split(key)
    token_ids = jax.random.randint(k_tok, (seq_len,), 0, vocab_size)
    params = init_params(k_par, vocab_size, d_model)
    packed = prepare_params(params, d_model, num_heads, max_seq_len=seq_len)

    out = encoder_forward(token_ids, packed, d_model=d_model,
                          num_heads=num_heads, causal=causal)
    out = jax.block_until_ready(out)

    ref = ref_forward(token_ids, params, num_heads=num_heads, causal=causal)
    assert out.shape == (1, seq_len, d_model), out.shape
    # tolerance accounts for bf16 MXU operands (f32 accumulation) and the EUP
    # approximate-reciprocal softmax normalization vs the exact f32 reference
    max_err = float(jnp.max(jnp.abs(out - ref)))
    assert jnp.allclose(out, ref, rtol=5e-2, atol=5e-2), max_err

    print("KERNEL_OK")
</pallas_src>

<mosaic_0001>
module attributes {stable_mosaic.version = 11 : i64} {
  func.func @encoder_kernel(%arg0: memref<8xi32, #tpu.memory_space<smem>>, %arg1: memref<64x128xf32, #tpu.memory_space<any>>, %arg2: memref<8x128xf32, #tpu.memory_space<vmem>>, %arg3: memref<128x1536xbf16, #tpu.memory_space<vmem>>, %arg4: memref<1x1536xf32, #tpu.memory_space<vmem>>, %arg5: memref<4x128x128xbf16, #tpu.memory_space<vmem>>, %arg6: memref<1x128xf32, #tpu.memory_space<vmem>>, %arg7: memref<8x128xf32, #tpu.memory_space<vmem>>, %arg8: memref<8x128xf32, #tpu.memory_space<vmem>>, %arg9: memref<8x!tpu.dma_semaphore, #tpu.memory_space<semaphore_mem>>) attributes {dimension_semantics = [], scalar_prefetch = 0 : i64, scratch_operands = 2 : i64, tpu.core_type = #tpu.core_type<tc>} {
    %c0 = arith.constant 0 : index
    %0 = memref.load %arg0[%c0] : memref<8xi32, #tpu.memory_space<smem>>
    %c0_i32 = arith.constant 0 : i32
    %c0_i32_0 = arith.constant 0 : i32
    %1 = tpu.memref_slice %arg1[%0, %c0_i32_0] : memref<64x128xf32, #tpu.memory_space<any>> -> memref<1x128xf32, #tpu.memory_space<any>>
    %c0_i32_1 = arith.constant 0 : i32
    %c0_i32_2 = arith.constant 0 : i32
    %2 = tpu.memref_slice %arg8[%c0_i32_1, %c0_i32_2] : memref<8x128xf32, #tpu.memory_space<vmem>> -> memref<1x128xf32, #tpu.memory_space<vmem>>
    %3 = tpu.memref_slice %arg9[%c0_i32] : memref<8x!tpu.dma_semaphore, #tpu.memory_space<semaphore_mem>> -> memref<1x!tpu.dma_semaphore, #tpu.memory_space<semaphore_mem>>
    %4 = tpu.memref_squeeze %3 : memref<1x!tpu.dma_semaphore, #tpu.memory_space<semaphore_mem>> -> memref<!tpu.dma_semaphore, #tpu.memory_space<semaphore_mem>>
    tpu.enqueue_dma source(%1 : memref<1x128xf32, #tpu.memory_space<any>>) target(%2 : memref<1x128xf32, #tpu.memory_space<vmem>>) target_semaphore(%4 : memref<!tpu.dma_semaphore, #tpu.memory_space<semaphore_mem>>)
    %c1 = arith.constant 1 : index
    %5 = memref.load %arg0[%c1] : memref<8xi32, #tpu.memory_space<smem>>
    %c1_i32 = arith.constant 1 : i32
    %c0_i32_3 = arith.constant 0 : i32
    %6 = tpu.memref_slice %arg1[%5, %c0_i32_3] : memref<64x128xf32, #tpu.memory_space<any>> -> memref<1x128xf32, #tpu.memory_space<any>>
    %c1_i32_4 = arith.constant 1 : i32
    %c0_i32_5 = arith.constant 0 : i32
    %7 = tpu.memref_slice %arg8[%c1_i32_4, %c0_i32_5] : memref<8x128xf32, #tpu.memory_space<vmem>> -> memref<1x128xf32, #tpu.memory_space<vmem>>
    %8 = tpu.memref_slice %arg9[%c1_i32] : memref<8x!tpu.dma_semaphore, #tpu.memory_space<semaphore_mem>> -> memref<1x!tpu.dma_semaphore, #tpu.memory_space<semaphore_mem>>
    %9 = tpu.memref_squeeze %8 : memref<1x!tpu.dma_semaphore, #tpu.memory_space<semaphore_mem>> -> memref<!tpu.dma_semaphore, #tpu.memory_space<semaphore_mem>>
    tpu.enqueue_dma source(%6 : memref<1x128xf32, #tpu.memory_space<any>>) target(%7 : memref<1x128xf32, #tpu.memory_space<vmem>>) target_semaphore(%9 : memref<!tpu.dma_semaphore, #tpu.memory_space<semaphore_mem>>)
    %c2 = arith.constant 2 : index
    %10 = memref.load %arg0[%c2] : memref<8xi32, #tpu.memory_space<smem>>
    %c2_i32 = arith.constant 2 : i32
    %c0_i32_6 = arith.constant 0 : i32
    %11 = tpu.memref_slice %arg1[%10, %c0_i32_6] : memref<64x128xf32, #tpu.memory_space<any>> -> memref<1x128xf32, #tpu.memory_space<any>>
    %c2_i32_7 = arith.constant 2 : i32
    %c0_i32_8 = arith.constant 0 : i32
    %12 = tpu.memref_slice %arg8[%c2_i32_7, %c0_i32_8] : memref<8x128xf32, #tpu.memory_space<vmem>> -> memref<1x128xf32, #tpu.memory_space<vmem>>
    %13 = tpu.memref_slice %arg9[%c2_i32] : memref<8x!tpu.dma_semaphore, #tpu.memory_space<semaphore_mem>> -> memref<1x!tpu.dma_semaphore, #tpu.memory_space<semaphore_mem>>
    %14 = tpu.memref_squeeze %13 : memref<1x!tpu.dma_semaphore, #tpu.memory_space<semaphore_mem>> -> memref<!tpu.dma_semaphore, #tpu.memory_space<semaphore_mem>>
    tpu.enqueue_dma source(%11 : memref<1x128xf32, #tpu.memory_space<any>>) target(%12 : memref<1x128xf32, #tpu.memory_space<vmem>>) target_semaphore(%14 : memref<!tpu.dma_semaphore, #tpu.memory_space<semaphore_mem>>)
    %c3 = arith.constant 3 : index
    %15 = memref.load %arg0[%c3] : memref<8xi32, #tpu.memory_space<smem>>
    %c3_i32 = arith.constant 3 : i32
    %c0_i32_9 = arith.constant 0 : i32
    %16 = tpu.memref_slice %arg1[%15, %c0_i32_9] : memref<64x128xf32, #tpu.memory_space<any>> -> memref<1x128xf32, #tpu.memory_space<any>>
    %c3_i32_10 = arith.constant 3 : i32
    %c0_i32_11 = arith.constant 0 : i32
    %17 = tpu.memref_slice %arg8[%c3_i32_10, %c0_i32_11] : memref<8x128xf32, #tpu.memory_space<vmem>> -> memref<1x128xf32, #tpu.memory_space<vmem>>
    %18 = tpu.memref_slice %arg9[%c3_i32] : memref<8x!tpu.dma_semaphore, #tpu.memory_space<semaphore_mem>> -> memref<1x!tpu.dma_semaphore, #tpu.memory_space<semaphore_mem>>
    %19 = tpu.memref_squeeze %18 : memref<1x!tpu.dma_semaphore, #tpu.memory_space<semaphore_mem>> -> memref<!tpu.dma_semaphore, #tpu.memory_space<semaphore_mem>>
    tpu.enqueue_dma source(%16 : memref<1x128xf32, #tpu.memory_space<any>>) target(%17 : memref<1x128xf32, #tpu.memory_space<vmem>>) target_semaphore(%19 : memref<!tpu.dma_semaphore, #tpu.memory_space<semaphore_mem>>)
    %c4 = arith.constant 4 : index
    %20 = memref.load %arg0[%c4] : memref<8xi32, #tpu.memory_space<smem>>
    %c4_i32 = arith.constant 4 : i32
    %c0_i32_12 = arith.constant 0 : i32
    %21 = tpu.memref_slice %arg1[%20, %c0_i32_12] : memref<64x128xf32, #tpu.memory_space<any>> -> memref<1x128xf32, #tpu.memory_space<any>>
    %c4_i32_13 = arith.constant 4 : i32
    %c0_i32_14 = arith.constant 0 : i32
    %22 = tpu.memref_slice %arg8[%c4_i32_13, %c0_i32_14] : memref<8x128xf32, #tpu.memory_space<vmem>> -> memref<1x128xf32, #tpu.memory_space<vmem>>
    %23 = tpu.memref_slice %arg9[%c4_i32] : memref<8x!tpu.dma_semaphore, #tpu.memory_space<semaphore_mem>> -> memref<1x!tpu.dma_semaphore, #tpu.memory_space<semaphore_mem>>
    %24 = tpu.memref_squeeze %23 : memref<1x!tpu.dma_semaphore, #tpu.memory_space<semaphore_mem>> -> memref<!tpu.dma_semaphore, #tpu.memory_space<semaphore_mem>>
    tpu.enqueue_dma source(%21 : memref<1x128xf32, #tpu.memory_space<any>>) target(%22 : memref<1x128xf32, #tpu.memory_space<vmem>>) target_semaphore(%24 : memref<!tpu.dma_semaphore, #tpu.memory_space<semaphore_mem>>)
    %c5 = arith.constant 5 : index
    %25 = memref.load %arg0[%c5] : memref<8xi32, #tpu.memory_space<smem>>
    %c5_i32 = arith.constant 5 : i32
    %c0_i32_15 = arith.constant 0 : i32
    %26 = tpu.memref_slice %arg1[%25, %c0_i32_15] : memref<64x128xf32, #tpu.memory_space<any>> -> memref<1x128xf32, #tpu.memory_space<any>>
    %c5_i32_16 = arith.constant 5 : i32
    %c0_i32_17 = arith.constant 0 : i32
    %27 = tpu.memref_slice %arg8[%c5_i32_16, %c0_i32_17] : memref<8x128xf32, #tpu.memory_space<vmem>> -> memref<1x128xf32, #tpu.memory_space<vmem>>
    %28 = tpu.memref_slice %arg9[%c5_i32] : memref<8x!tpu.dma_semaphore, #tpu.memory_space<semaphore_mem>> -> memref<1x!tpu.dma_semaphore, #tpu.memory_space<semaphore_mem>>
    %29 = tpu.memref_squeeze %28 : memref<1x!tpu.dma_semaphore, #tpu.memory_space<semaphore_mem>> -> memref<!tpu.dma_semaphore, #tpu.memory_space<semaphore_mem>>
    tpu.enqueue_dma source(%26 : memref<1x128xf32, #tpu.memory_space<any>>) target(%27 : memref<1x128xf32, #tpu.memory_space<vmem>>) target_semaphore(%29 : memref<!tpu.dma_semaphore, #tpu.memory_space<semaphore_mem>>)
    %c6 = arith.constant 6 : index
    %30 = memref.load %arg0[%c6] : memref<8xi32, #tpu.memory_space<smem>>
    %c6_i32 = arith.constant 6 : i32
    %c0_i32_18 = arith.constant 0 : i32
    %31 = tpu.memref_slice %arg1[%30, %c0_i32_18] : memref<64x128xf32, #tpu.memory_space<any>> -> memref<1x128xf32, #tpu.memory_space<any>>
    %c6_i32_19 = arith.constant 6 : i32
    %c0_i32_20 = arith.constant 0 : i32
    %32 = tpu.memref_slice %arg8[%c6_i32_19, %c0_i32_20] : memref<8x128xf32, #tpu.memory_space<vmem>> -> memref<1x128xf32, #tpu.memory_space<vmem>>
    %33 = tpu.memref_slice %arg9[%c6_i32] : memref<8x!tpu.dma_semaphore, #tpu.memory_space<semaphore_mem>> -> memref<1x!tpu.dma_semaphore, #tpu.memory_space<semaphore_mem>>
    %34 = tpu.memref_squeeze %33 : memref<1x!tpu.dma_semaphore, #tpu.memory_space<semaphore_mem>> -> memref<!tpu.dma_semaphore, #tpu.memory_space<semaphore_mem>>
    tpu.enqueue_dma source(%31 : memref<1x128xf32, #tpu.memory_space<any>>) target(%32 : memref<1x128xf32, #tpu.memory_space<vmem>>) target_semaphore(%34 : memref<!tpu.dma_semaphore, #tpu.memory_space<semaphore_mem>>)
    %c7 = arith.constant 7 : index
    %35 = memref.load %arg0[%c7] : memref<8xi32, #tpu.memory_space<smem>>
    %c7_i32 = arith.constant 7 : i32
    %c0_i32_21 = arith.constant 0 : i32
    %36 = tpu.memref_slice %arg1[%35, %c0_i32_21] : memref<64x128xf32, #tpu.memory_space<any>> -> memref<1x128xf32, #tpu.memory_space<any>>
    %c7_i32_22 = arith.constant 7 : i32
    %c0_i32_23 = arith.constant 0 : i32
    %37 = tpu.memref_slice %arg8[%c7_i32_22, %c0_i32_23] : memref<8x128xf32, #tpu.memory_space<vmem>> -> memref<1x128xf32, #tpu.memory_space<vmem>>
    %38 = tpu.memref_slice %arg9[%c7_i32] : memref<8x!tpu.dma_semaphore, #tpu.memory_space<semaphore_mem>> -> memref<1x!tpu.dma_semaphore, #tpu.memory_space<semaphore_mem>>
    %39 = tpu.memref_squeeze %38 : memref<1x!tpu.dma_semaphore, #tpu.memory_space<semaphore_mem>> -> memref<!tpu.dma_semaphore, #tpu.memory_space<semaphore_mem>>
    tpu.enqueue_dma source(%36 : memref<1x128xf32, #tpu.memory_space<any>>) target(%37 : memref<1x128xf32, #tpu.memory_space<vmem>>) target_semaphore(%39 : memref<!tpu.dma_semaphore, #tpu.memory_space<semaphore_mem>>)
    %c0_i32_24 = arith.constant 0 : i32
    %c0_i32_25 = arith.constant 0 : i32
    %c0_i32_26 = arith.constant 0 : i32
    %40 = tpu.memref_slice %arg1[%c0_i32_25, %c0_i32_26] : memref<64x128xf32, #tpu.memory_space<any>> -> memref<1x128xf32, #tpu.memory_space<any>>
    %c0_i32_27 = arith.constant 0 : i32
    %c0_i32_28 = arith.constant 0 : i32
    %41 = tpu.memref_slice %arg8[%c0_i32_27, %c0_i32_28] : memref<8x128xf32, #tpu.memory_space<vmem>> -> memref<1x128xf32, #tpu.memory_space<vmem>>
    %42 = tpu.memref_slice %arg9[%c0_i32_24] : memref<8x!tpu.dma_semaphore, #tpu.memory_space<semaphore_mem>> -> memref<1x!tpu.dma_semaphore, #tpu.memory_space<semaphore_mem>>
    %43 = tpu.memref_squeeze %42 : memref<1x!tpu.dma_semaphore, #tpu.memory_space<semaphore_mem>> -> memref<!tpu.dma_semaphore, #tpu.memory_space<semaphore_mem>>
    tpu.wait_dma2 semaphore(%43 : memref<!tpu.dma_semaphore, #tpu.memory_space<semaphore_mem>>) src(%40 : memref<1x128xf32, #tpu.memory_space<any>>) dst(%41 : memref<1x128xf32, #tpu.memory_space<vmem>>)
    %c1_i32_29 = arith.constant 1 : i32
    %c0_i32_30 = arith.constant 0 : i32
    %c0_i32_31 = arith.constant 0 : i32
    %44 = tpu.memref_slice %arg1[%c0_i32_30, %c0_i32_31] : memref<64x128xf32, #tpu.memory_space<any>> -> memref<1x128xf32, #tpu.memory_space<any>>
    %c1_i32_32 = arith.constant 1 : i32
    %c0_i32_33 = arith.constant 0 : i32
    %45 = tpu.memref_slice %arg8[%c1_i32_32, %c0_i32_33] : memref<8x128xf32, #tpu.memory_space<vmem>> -> memref<1x128xf32, #tpu.memory_space<vmem>>
    %46 = tpu.memref_slice %arg9[%c1_i32_29] : memref<8x!tpu.dma_semaphore, #tpu.memory_space<semaphore_mem>> -> memref<1x!tpu.dma_semaphore, #tpu.memory_space<semaphore_mem>>
    %47 = tpu.memref_squeeze %46 : memref<1x!tpu.dma_semaphore, #tpu.memory_space<semaphore_mem>> -> memref<!tpu.dma_semaphore, #tpu.memory_space<semaphore_mem>>
    tpu.wait_dma2 semaphore(%47 : memref<!tpu.dma_semaphore, #tpu.memory_space<semaphore_mem>>) src(%44 : memref<1x128xf32, #tpu.memory_space<any>>) dst(%45 : memref<1x128xf32, #tpu.memory_space<vmem>>)
    %c2_i32_34 = arith.constant 2 : i32
    %c0_i32_35 = arith.constant 0 : i32
    %c0_i32_36 = arith.constant 0 : i32
    %48 = tpu.memref_slice %arg1[%c0_i32_35, %c0_i32_36] : memref<64x128xf32, #tpu.memory_space<any>> -> memref<1x128xf32, #tpu.memory_space<any>>
    %c2_i32_37 = arith.constant 2 : i32
    %c0_i32_38 = arith.constant 0 : i32
    %49 = tpu.memref_slice %arg8[%c2_i32_37, %c0_i32_38] : memref<8x128xf32, #tpu.memory_space<vmem>> -> memref<1x128xf32, #tpu.memory_space<vmem>>
    %50 = tpu.memref_slice %arg9[%c2_i32_34] : memref<8x!tpu.dma_semaphore, #tpu.memory_space<semaphore_mem>> -> memref<1x!tpu.dma_semaphore, #tpu.memory_space<semaphore_mem>>
    %51 = tpu.memref_squeeze %50 : memref<1x!tpu.dma_semaphore, #tpu.memory_space<semaphore_mem>> -> memref<!tpu.dma_semaphore, #tpu.memory_space<semaphore_mem>>
    tpu.wait_dma2 semaphore(%51 : memref<!tpu.dma_semaphore, #tpu.memory_space<semaphore_mem>>) src(%48 : memref<1x128xf32, #tpu.memory_space<any>>) dst(%49 : memref<1x128xf32, #tpu.memory_space<vmem>>)
    %c3_i32_39 = arith.constant 3 : i32
    %c0_i32_40 = arith.constant 0 : i32
    %c0_i32_41 = arith.constant 0 : i32
    %52 = tpu.memref_slice %arg1[%c0_i32_40, %c0_i32_41] : memref<64x128xf32, #tpu.memory_space<any>> -> memref<1x128xf32, #tpu.memory_space<any>>
    %c3_i32_42 = arith.constant 3 : i32
    %c0_i32_43 = arith.constant 0 : i32
    %53 = tpu.memref_slice %arg8[%c3_i32_42, %c0_i32_43] : memref<8x128xf32, #tpu.memory_space<vmem>> -> memref<1x128xf32, #tpu.memory_space<vmem>>
    %54 = tpu.memref_slice %arg9[%c3_i32_39] : memref<8x!tpu.dma_semaphore, #tpu.memory_space<semaphore_mem>> -> memref<1x!tpu.dma_semaphore, #tpu.memory_space<semaphore_mem>>
    %55 = tpu.memref_squeeze %54 : memref<1x!tpu.dma_semaphore, #tpu.memory_space<semaphore_mem>> -> memref<!tpu.dma_semaphore, #tpu.memory_space<semaphore_mem>>
    tpu.wait_dma2 semaphore(%55 : memref<!tpu.dma_semaphore, #tpu.memory_space<semaphore_mem>>) src(%52 : memref<1x128xf32, #tpu.memory_space<any>>) dst(%53 : memref<1x128xf32, #tpu.memory_space<vmem>>)
    %c4_i32_44 = arith.constant 4 : i32
    %c0_i32_45 = arith.constant 0 : i32
    %c0_i32_46 = arith.constant 0 : i32
    %56 = tpu.memref_slice %arg1[%c0_i32_45, %c0_i32_46] : memref<64x128xf32, #tpu.memory_space<any>> -> memref<1x128xf32, #tpu.memory_space<any>>
    %c4_i32_47 = arith.constant 4 : i32
    %c0_i32_48 = arith.constant 0 : i32
    %57 = tpu.memref_slice %arg8[%c4_i32_47, %c0_i32_48] : memref<8x128xf32, #tpu.memory_space<vmem>> -> memref<1x128xf32, #tpu.memory_space<vmem>>
    %58 = tpu.memref_slice %arg9[%c4_i32_44] : memref<8x!tpu.dma_semaphore, #tpu.memory_space<semaphore_mem>> -> memref<1x!tpu.dma_semaphore, #tpu.memory_space<semaphore_mem>>
    %59 = tpu.memref_squeeze %58 : memref<1x!tpu.dma_semaphore, #tpu.memory_space<semaphore_mem>> -> memref<!tpu.dma_semaphore, #tpu.memory_space<semaphore_mem>>
    tpu.wait_dma2 semaphore(%59 : memref<!tpu.dma_semaphore, #tpu.memory_space<semaphore_mem>>) src(%56 : memref<1x128xf32, #tpu.memory_space<any>>) dst(%57 : memref<1x128xf32, #tpu.memory_space<vmem>>)
    %c5_i32_49 = arith.constant 5 : i32
    %c0_i32_50 = arith.constant 0 : i32
    %c0_i32_51 = arith.constant 0 : i32
    %60 = tpu.memref_slice %arg1[%c0_i32_50, %c0_i32_51] : memref<64x128xf32, #tpu.memory_space<any>> -> memref<1x128xf32, #tpu.memory_space<any>>
    %c5_i32_52 = arith.constant 5 : i32
    %c0_i32_53 = arith.constant 0 : i32
    %61 = tpu.memref_slice %arg8[%c5_i32_52, %c0_i32_53] : memref<8x128xf32, #tpu.memory_space<vmem>> -> memref<1x128xf32, #tpu.memory_space<vmem>>
    %62 = tpu.memref_slice %arg9[%c5_i32_49] : memref<8x!tpu.dma_semaphore, #tpu.memory_space<semaphore_mem>> -> memref<1x!tpu.dma_semaphore, #tpu.memory_space<semaphore_mem>>
    %63 = tpu.memref_squeeze %62 : memref<1x!tpu.dma_semaphore, #tpu.memory_space<semaphore_mem>> -> memref<!tpu.dma_semaphore, #tpu.memory_space<semaphore_mem>>
    tpu.wait_dma2 semaphore(%63 : memref<!tpu.dma_semaphore, #tpu.memory_space<semaphore_mem>>) src(%60 : memref<1x128xf32, #tpu.memory_space<any>>) dst(%61 : memref<1x128xf32, #tpu.memory_space<vmem>>)
    %c6_i32_54 = arith.constant 6 : i32
    %c0_i32_55 = arith.constant 0 : i32
    %c0_i32_56 = arith.constant 0 : i32
    %64 = tpu.memref_slice %arg1[%c0_i32_55, %c0_i32_56] : memref<64x128xf32, #tpu.memory_space<any>> -> memref<1x128xf32, #tpu.memory_space<any>>
    %c6_i32_57 = arith.constant 6 : i32
    %c0_i32_58 = arith.constant 0 : i32
    %65 = tpu.memref_slice %arg8[%c6_i32_57, %c0_i32_58] : memref<8x128xf32, #tpu.memory_space<vmem>> -> memref<1x128xf32, #tpu.memory_space<vmem>>
    %66 = tpu.memref_slice %arg9[%c6_i32_54] : memref<8x!tpu.dma_semaphore, #tpu.memory_space<semaphore_mem>> -> memref<1x!tpu.dma_semaphore, #tpu.memory_space<semaphore_mem>>
    %67 = tpu.memref_squeeze %66 : memref<1x!tpu.dma_semaphore, #tpu.memory_space<semaphore_mem>> -> memref<!tpu.dma_semaphore, #tpu.memory_space<semaphore_mem>>
    tpu.wait_dma2 semaphore(%67 : memref<!tpu.dma_semaphore, #tpu.memory_space<semaphore_mem>>) src(%64 : memref<1x128xf32, #tpu.memory_space<any>>) dst(%65 : memref<1x128xf32, #tpu.memory_space<vmem>>)
    %c7_i32_59 = arith.constant 7 : i32
    %c0_i32_60 = arith.constant 0 : i32
    %c0_i32_61 = arith.constant 0 : i32
    %68 = tpu.memref_slice %arg1[%c0_i32_60, %c0_i32_61] : memref<64x128xf32, #tpu.memory_space<any>> -> memref<1x128xf32, #tpu.memory_space<any>>
    %c7_i32_62 = arith.constant 7 : i32
    %c0_i32_63 = arith.constant 0 : i32
    %69 = tpu.memref_slice %arg8[%c7_i32_62, %c0_i32_63] : memref<8x128xf32, #tpu.memory_space<vmem>> -> memref<1x128xf32, #tpu.memory_space<vmem>>
    %70 = tpu.memref_slice %arg9[%c7_i32_59] : memref<8x!tpu.dma_semaphore, #tpu.memory_space<semaphore_mem>> -> memref<1x!tpu.dma_semaphore, #tpu.memory_space<semaphore_mem>>
    %71 = tpu.memref_squeeze %70 : memref<1x!tpu.dma_semaphore, #tpu.memory_space<semaphore_mem>> -> memref<!tpu.dma_semaphore, #tpu.memory_space<semaphore_mem>>
    tpu.wait_dma2 semaphore(%71 : memref<!tpu.dma_semaphore, #tpu.memory_space<semaphore_mem>>) src(%68 : memref<1x128xf32, #tpu.memory_space<any>>) dst(%69 : memref<1x128xf32, #tpu.memory_space<vmem>>)
    %c0_64 = arith.constant 0 : index
    %c0_65 = arith.constant 0 : index
    %72 = vector.load %arg8[%c0_64, %c0_65] : memref<8x128xf32, #tpu.memory_space<vmem>>, vector<8x128xf32>
    %c0_66 = arith.constant 0 : index
    %c0_67 = arith.constant 0 : index
    %73 = vector.load %arg2[%c0_66, %c0_67] : memref<8x128xf32, #tpu.memory_space<vmem>>, vector<8x128xf32>
    %74 = arith.addf %72, %73 : vector<8x128xf32>
    %75 = arith.truncf %74 : vector<8x128xf32> to vector<8x128xbf16>
    %c0_68 = arith.constant 0 : index
    %c0_69 = arith.constant 0 : index
    %76 = vector.load %arg3[%c0_68, %c0_69] : memref<128x1536xbf16, #tpu.memory_space<vmem>>, vector<128x1536xbf16>
    %cst = arith.constant dense<0.000000e+00> : vector<8x1536xf32>
    %77 = tpu.matmul %75, %76, %cst {dimension_numbers = #tpu.dot_dimension_numbers<[1], [0], [0], [1], [0, 0, 1, 1], [], []>} : vector<8x128xbf16>, vector<128x1536xbf16>, vector<8x1536xf32> -> vector<8x1536xf32>
    %c0_70 = arith.constant 0 : index
    %c0_71 = arith.constant 0 : index
    %78 = vector.load %arg4[%c0_70, %c0_71] : memref<1x1536xf32, #tpu.memory_space<vmem>>, vector<1x1536xf32>
    %79 = vector.broadcast %78 : vector<1x1536xf32> to vector<8x1536xf32>
    %80 = arith.addf %77, %79 : vector<8x1536xf32>
    %81 = tpu.iota {dimensions = array<i32: 0>} : vector<8x8xi32>
    %82 = tpu.iota {dimensions = array<i32: 1>} : vector<8x8xi32>
    %83 = arith.cmpi sgt, %82, %81 : vector<8x8xi32>
    %cst_72 = arith.constant -1.000000e+30 : f32
    %cst_73 = arith.constant 0.000000e+00 : f32
    %84 = vector.broadcast %cst_72 : f32 to vector<8x8xf32>
    %85 = vector.broadcast %cst_73 : f32 to vector<8x8xf32>
    %86 = arith.select %83, %84, %85 : vector<8x8xi1>, vector<8x8xf32>
    %cst_74 = arith.constant 0.000000e+00 : f32
    %87 = vector.broadcast %cst_74 : f32 to vector<8x128xf32>
    %88 = vector.extract_strided_slice %80 {offsets = [0, 0], sizes = [8, 128], strides = [1, 1]} : vector<8x1536xf32> to vector<8x128xf32>
    %89 = arith.truncf %88 : vector<8x128xf32> to vector<8x128xbf16>
    %90 = vector.extract_strided_slice %80 {offsets = [0, 512], sizes = [8, 128], strides = [1, 1]} : vector<8x1536xf32> to vector<8x128xf32>
    %91 = arith.truncf %90 : vector<8x128xf32> to vector<8x128xbf16>
    %92 = vector.extract_strided_slice %80 {offsets = [0, 1024], sizes = [8, 128], strides = [1, 1]} : vector<8x1536xf32> to vector<8x128xf32>
    %93 = arith.truncf %92 : vector<8x128xf32> to vector<8x128xbf16>
    %cst_75 = arith.constant dense<0.000000e+00> : vector<8x8xf32>
    %94 = tpu.matmul %89, %91, %cst_75 {dimension_numbers = #tpu.dot_dimension_numbers<[1], [1], [0], [0], [0, 0, 1, 0], [], []>} : vector<8x128xbf16>, vector<8x128xbf16>, vector<8x8xf32> -> vector<8x8xf32>
    %cst_76 = arith.constant 0.353553385 : f32
    %95 = vector.broadcast %cst_76 : f32 to vector<8x8xf32>
    %96 = arith.mulf %94, %95 : vector<8x8xf32>
    %97 = arith.addf %96, %86 : vector<8x8xf32>
    %cst_77 = arith.constant dense<0xFF800000> : vector<8xf32>
    %98 = vector.multi_reduction <maximumf>, %97, %cst_77 [1] : vector<8x8xf32> to vector<8xf32>
    %99 = vector.shape_cast %98 : vector<8xf32> to vector<8x1xf32>
    %100 = vector.broadcast %99 : vector<8x1xf32> to vector<8x8xf32>
    %101 = arith.subf %97, %100 : vector<8x8xf32>
    %102 = math.exp %101 : vector<8x8xf32>
    %cst_78 = arith.constant dense<0.000000e+00> : vector<8xf32>
    %103 = vector.multi_reduction <add>, %102, %cst_78 [1] : vector<8x8xf32> to vector<8xf32>
    %104 = vector.shape_cast %103 : vector<8xf32> to vector<8x1xf32>
    %105 = tpu.reciprocal %104 {approx = true} : vector<8x1xf32> -> vector<8x1xf32>
    %106 = vector.broadcast %105 : vector<8x1xf32> to vector<8x8xf32>
    %107 = arith.mulf %102, %106 : vector<8x8xf32>
    %108 = arith.truncf %107 : vector<8x8xf32> to vector<8x8xbf16>
    %cst_79 = arith.constant dense<0.000000e+00> : vector<8x128xf32>
    %109 = tpu.matmul %108, %93, %cst_79 {dimension_numbers = #tpu.dot_dimension_numbers<[1], [0], [0], [1], [0, 0, 1, 1], [], []>} : vector<8x8xbf16>, vector<8x128xbf16>, vector<8x128xf32> -> vector<8x128xf32>
    %110 = arith.truncf %109 : vector<8x128xf32> to vector<8x128xbf16>
    %c0_80 = arith.constant 0 : index
    %c0_81 = arith.constant 0 : index
    %c0_82 = arith.constant 0 : index
    %111 = vector.load %arg5[%c0_80, %c0_81, %c0_82] : memref<4x128x128xbf16, #tpu.memory_space<vmem>>, vector<1x128x128xbf16>
    %112 = vector.shape_cast %111 : vector<1x128x128xbf16> to vector<128x128xbf16>
    %cst_83 = arith.constant dense<0.000000e+00> : vector<8x128xf32>
    %113 = tpu.matmul %110, %112, %cst_83 {dimension_numbers = #tpu.dot_dimension_numbers<[1], [0], [0], [1], [0, 0, 1, 1], [], []>} : vector<8x128xbf16>, vector<128x128xbf16>, vector<8x128xf32> -> vector<8x128xf32>
    %114 = arith.addf %87, %113 : vector<8x128xf32>
    %115 = vector.extract_strided_slice %80 {offsets = [0, 128], sizes = [8, 128], strides = [1, 1]} : vector<8x1536xf32> to vector<8x128xf32>
    %116 = arith.truncf %115 : vector<8x128xf32> to vector<8x128xbf16>
    %117 = vector.extract_strided_slice %80 {offsets = [0, 640], sizes = [8, 128], strides = [1, 1]} : vector<8x1536xf32> to vector<8x128xf32>
    %118 = arith.truncf %117 : vector<8x128xf32> to vector<8x128xbf16>
    %119 = vector.extract_strided_slice %80 {offsets = [0, 1152], sizes = [8, 128], strides = [1, 1]} : vector<8x1536xf32> to vector<8x128xf32>
    %120 = arith.truncf %119 : vector<8x128xf32> to vector<8x128xbf16>
    %cst_84 = arith.constant dense<0.000000e+00> : vector<8x8xf32>
    %121 = tpu.matmul %116, %118, %cst_84 {dimension_numbers = #tpu.dot_dimension_numbers<[1], [1], [0], [0], [0, 0, 1, 0], [], []>} : vector<8x128xbf16>, vector<8x128xbf16>, vector<8x8xf32> -> vector<8x8xf32>
    %cst_85 = arith.constant 0.353553385 : f32
    %122 = vector.broadcast %cst_85 : f32 to vector<8x8xf32>
    %123 = arith.mulf %121, %122 : vector<8x8xf32>
    %124 = arith.addf %123, %86 : vector<8x8xf32>
    %cst_86 = arith.constant dense<0xFF800000> : vector<8xf32>
    %125 = vector.multi_reduction <maximumf>, %124, %cst_86 [1] : vector<8x8xf32> to vector<8xf32>
    %126 = vector.shape_cast %125 : vector<8xf32> to vector<8x1xf32>
    %127 = vector.broadcast %126 : vector<8x1xf32> to vector<8x8xf32>
    %128 = arith.subf %124, %127 : vector<8x8xf32>
    %129 = math.exp %128 : vector<8x8xf32>
    %cst_87 = arith.constant dense<0.000000e+00> : vector<8xf32>
    %130 = vector.multi_reduction <add>, %129, %cst_87 [1] : vector<8x8xf32> to vector<8xf32>
    %131 = vector.shape_cast %130 : vector<8xf32> to vector<8x1xf32>
    %132 = tpu.reciprocal %131 {approx = true} : vector<8x1xf32> -> vector<8x1xf32>
    %133 = vector.broadcast %132 : vector<8x1xf32> to vector<8x8xf32>
    %134 = arith.mulf %129, %133 : vector<8x8xf32>
    %135 = arith.truncf %134 : vector<8x8xf32> to vector<8x8xbf16>
    %cst_88 = arith.constant dense<0.000000e+00> : vector<8x128xf32>
    %136 = tpu.matmul %135, %120, %cst_88 {dimension_numbers = #tpu.dot_dimension_numbers<[1], [0], [0], [1], [0, 0, 1, 1], [], []>} : vector<8x8xbf16>, vector<8x128xbf16>, vector<8x128xf32> -> vector<8x128xf32>
    %137 = arith.truncf %136 : vector<8x128xf32> to vector<8x128xbf16>
    %c1_89 = arith.constant 1 : index
    %c0_90 = arith.constant 0 : index
    %c0_91 = arith.constant 0 : index
    %138 = vector.load %arg5[%c1_89, %c0_90, %c0_91] : memref<4x128x128xbf16, #tpu.memory_space<vmem>>, vector<1x128x128xbf16>
    %139 = vector.shape_cast %138 : vector<1x128x128xbf16> to vector<128x128xbf16>
    %cst_92 = arith.constant dense<0.000000e+00> : vector<8x128xf32>
    %140 = tpu.matmul %137, %139, %cst_92 {dimension_numbers = #tpu.dot_dimension_numbers<[1], [0], [0], [1], [0, 0, 1, 1], [], []>} : vector<8x128xbf16>, vector<128x128xbf16>, vector<8x128xf32> -> vector<8x128xf32>
    %141 = arith.addf %114, %140 : vector<8x128xf32>
    %142 = vector.extract_strided_slice %80 {offsets = [0, 256], sizes = [8, 128], strides = [1, 1]} : vector<8x1536xf32> to vector<8x128xf32>
    %143 = arith.truncf %142 : vector<8x128xf32> to vector<8x128xbf16>
    %144 = vector.extract_strided_slice %80 {offsets = [0, 768], sizes = [8, 128], strides = [1, 1]} : vector<8x1536xf32> to vector<8x128xf32>
    %145 = arith.truncf %144 : vector<8x128xf32> to vector<8x128xbf16>
    %146 = vector.extract_strided_slice %80 {offsets = [0, 1280], sizes = [8, 128], strides = [1, 1]} : vector<8x1536xf32> to vector<8x128xf32>
    %147 = arith.truncf %146 : vector<8x128xf32> to vector<8x128xbf16>
    %cst_93 = arith.constant dense<0.000000e+00> : vector<8x8xf32>
    %148 = tpu.matmul %143, %145, %cst_93 {dimension_numbers = #tpu.dot_dimension_numbers<[1], [1], [0], [0], [0, 0, 1, 0], [], []>} : vector<8x128xbf16>, vector<8x128xbf16>, vector<8x8xf32> -> vector<8x8xf32>
    %cst_94 = arith.constant 0.353553385 : f32
    %149 = vector.broadcast %cst_94 : f32 to vector<8x8xf32>
    %150 = arith.mulf %148, %149 : vector<8x8xf32>
    %151 = arith.addf %150, %86 : vector<8x8xf32>
    %cst_95 = arith.constant dense<0xFF800000> : vector<8xf32>
    %152 = vector.multi_reduction <maximumf>, %151, %cst_95 [1] : vector<8x8xf32> to vector<8xf32>
    %153 = vector.shape_cast %152 : vector<8xf32> to vector<8x1xf32>
    %154 = vector.broadcast %153 : vector<8x1xf32> to vector<8x8xf32>
    %155 = arith.subf %151, %154 : vector<8x8xf32>
    %156 = math.exp %155 : vector<8x8xf32>
    %cst_96 = arith.constant dense<0.000000e+00> : vector<8xf32>
    %157 = vector.multi_reduction <add>, %156, %cst_96 [1] : vector<8x8xf32> to vector<8xf32>
    %158 = vector.shape_cast %157 : vector<8xf32> to vector<8x1xf32>
    %159 = tpu.reciprocal %158 {approx = true} : vector<8x1xf32> -> vector<8x1xf32>
    %160 = vector.broadcast %159 : vector<8x1xf32> to vector<8x8xf32>
    %161 = arith.mulf %156, %160 : vector<8x8xf32>
    %162 = arith.truncf %161 : vector<8x8xf32> to vector<8x8xbf16>
    %cst_97 = arith.constant dense<0.000000e+00> : vector<8x128xf32>
    %163 = tpu.matmul %162, %147, %cst_97 {dimension_numbers = #tpu.dot_dimension_numbers<[1], [0], [0], [1], [0, 0, 1, 1], [], []>} : vector<8x8xbf16>, vector<8x128xbf16>, vector<8x128xf32> -> vector<8x128xf32>
    %164 = arith.truncf %163 : vector<8x128xf32> to vector<8x128xbf16>
    %c2_98 = arith.constant 2 : index
    %c0_99 = arith.constant 0 : index
    %c0_100 = arith.constant 0 : index
    %165 = vector.load %arg5[%c2_98, %c0_99, %c0_100] : memref<4x128x128xbf16, #tpu.memory_space<vmem>>, vector<1x128x128xbf16>
    %166 = vector.shape_cast %165 : vector<1x128x128xbf16> to vector<128x128xbf16>
    %cst_101 = arith.constant dense<0.000000e+00> : vector<8x128xf32>
    %167 = tpu.matmul %164, %166, %cst_101 {dimension_numbers = #tpu.dot_dimension_numbers<[1], [0], [0], [1], [0, 0, 1, 1], [], []>} : vector<8x128xbf16>, vector<128x128xbf16>, vector<8x128xf32> -> vector<8x128xf32>
    %168 = arith.addf %141, %167 : vector<8x128xf32>
    %169 = vector.extract_strided_slice %80 {offsets = [0, 384], sizes = [8, 128], strides = [1, 1]} : vector<8x1536xf32> to vector<8x128xf32>
    %170 = arith.truncf %169 : vector<8x128xf32> to vector<8x128xbf16>
    %171 = vector.extract_strided_slice %80 {offsets = [0, 896], sizes = [8, 128], strides = [1, 1]} : vector<8x1536xf32> to vector<8x128xf32>
    %172 = arith.truncf %171 : vector<8x128xf32> to vector<8x128xbf16>
    %173 = vector.extract_strided_slice %80 {offsets = [0, 1408], sizes = [8, 128], strides = [1, 1]} : vector<8x1536xf32> to vector<8x128xf32>
    %174 = arith.truncf %173 : vector<8x128xf32> to vector<8x128xbf16>
    %cst_102 = arith.constant dense<0.000000e+00> : vector<8x8xf32>
    %175 = tpu.matmul %170, %172, %cst_102 {dimension_numbers = #tpu.dot_dimension_numbers<[1], [1], [0], [0], [0, 0, 1, 0], [], []>} : vector<8x128xbf16>, vector<8x128xbf16>, vector<8x8xf32> -> vector<8x8xf32>
    %cst_103 = arith.constant 0.353553385 : f32
    %176 = vector.broadcast %cst_103 : f32 to vector<8x8xf32>
    %177 = arith.mulf %175, %176 : vector<8x8xf32>
    %178 = arith.addf %177, %86 : vector<8x8xf32>
    %cst_104 = arith.constant dense<0xFF800000> : vector<8xf32>
    %179 = vector.multi_reduction <maximumf>, %178, %cst_104 [1] : vector<8x8xf32> to vector<8xf32>
    %180 = vector.shape_cast %179 : vector<8xf32> to vector<8x1xf32>
    %181 = vector.broadcast %180 : vector<8x1xf32> to vector<8x8xf32>
    %182 = arith.subf %178, %181 : vector<8x8xf32>
    %183 = math.exp %182 : vector<8x8xf32>
    %cst_105 = arith.constant dense<0.000000e+00> : vector<8xf32>
    %184 = vector.multi_reduction <add>, %183, %cst_105 [1] : vector<8x8xf32> to vector<8xf32>
    %185 = vector.shape_cast %184 : vector<8xf32> to vector<8x1xf32>
    %186 = tpu.reciprocal %185 {approx = true} : vector<8x1xf32> -> vector<8x1xf32>
    %187 = vector.broadcast %186 : vector<8x1xf32> to vector<8x8xf32>
    %188 = arith.mulf %183, %187 : vector<8x8xf32>
    %189 = arith.truncf %188 : vector<8x8xf32> to vector<8x8xbf16>
    %cst_106 = arith.constant dense<0.000000e+00> : vector<8x128xf32>
    %190 = tpu.matmul %189, %174, %cst_106 {dimension_numbers = #tpu.dot_dimension_numbers<[1], [0], [0], [1], [0, 0, 1, 1], [], []>} : vector<8x8xbf16>, vector<8x128xbf16>, vector<8x128xf32> -> vector<8x128xf32>
    %191 = arith.truncf %190 : vector<8x128xf32> to vector<8x128xbf16>
    %c3_107 = arith.constant 3 : index
    %c0_108 = arith.constant 0 : index
    %c0_109 = arith.constant 0 : index
    %192 = vector.load %arg5[%c3_107, %c0_108, %c0_109] : memref<4x128x128xbf16, #tpu.memory_space<vmem>>, vector<1x128x128xbf16>
    %193 = vector.shape_cast %192 : vector<1x128x128xbf16> to vector<128x128xbf16>
    %cst_110 = arith.constant dense<0.000000e+00> : vector<8x128xf32>
    %194 = tpu.matmul %191, %193, %cst_110 {dimension_numbers = #tpu.dot_dimension_numbers<[1], [0], [0], [1], [0, 0, 1, 1], [], []>} : vector<8x128xbf16>, vector<128x128xbf16>, vector<8x128xf32> -> vector<8x128xf32>
    %195 = arith.addf %168, %194 : vector<8x128xf32>
    %c0_111 = arith.constant 0 : index
    %c0_112 = arith.constant 0 : index
    %196 = vector.load %arg6[%c0_111, %c0_112] : memref<1x128xf32, #tpu.memory_space<vmem>>, vector<1x128xf32>
    %197 = vector.broadcast %196 : vector<1x128xf32> to vector<8x128xf32>
    %198 = arith.addf %195, %197 : vector<8x128xf32>
    %c0_113 = arith.constant 0 : index
    %c0_114 = arith.constant 0 : index
    %199 = vector.load %arg7[%c0_113, %c0_114] : memref<8x128xf32, #tpu.memory_space<vmem>>, vector<8x128xf32>
    tpu.vector_store %arg7[%c0_113, %c0_114], %198 {strides = array<i32>} : memref<8x128xf32, #tpu.memory_space<vmem>>, vector<8x128xf32>,
    return
  }
}

</mosaic_0001>

<llo_original>
// kernel: tpu_custom_call.1
$region0: #{tpu_custom_call.1}
  #allocation0 [shape = 'u32[]', space=smem, size = 0x4, offset = 0x4, fixed_abs, tag = 'smem constant byte address 0x4 - core index']
  #allocation1 [shape = 'u32[144,128]{1,0:T(1,128)}', space=vmem, size = 0x12000, scoped, tag = 'internal scratch']
  #allocation2 [shape = 'f32[8,128]{1,0:T(8,128)}', space=vmem, size = 0x1000, scoped, tag = 'scratch operand']
  #allocation3 [shape = 's32[8]{0}', space=sflag, size = 0x20, scoped, tag = 'scratch operand']
  #allocation15 [shape = 's32[]', space=sflag, size = 0x4, offset = 0, fixed_abs, tag = 'sflag constant byte address 0x0 - dummy sync flag']
  #allocation16 [shape = 's32[]', space=sflag, size = 0x4, offset = 0, fixed_abs, tag = 'sflag constant byte address 0x0 - dummy sync flag']
  #allocation17 [shape = 'u32[]', space=smem, size = 0x4, offset = 0x44, fixed_abs, tag = 'smem constant byte address 0x44 - assertion arg 0']
  #allocation18 [shape = 'u32[]', space=smem, size = 0x4, offset = 0x48, fixed_abs, tag = 'smem constant byte address 0x48 - assertion arg 1']
  #allocation19 [shape = 's32[]', space=sflag, size = 0x4, offset = 0, fixed_abs, tag = 'sflag constant byte address 0x0 - dummy sync flag']
  #allocation20 [shape = 's32[]', space=sflag, size = 0x4, offset = 0, fixed_abs, tag = 'sflag constant byte address 0x0 - dummy sync flag']
  #allocation21 [shape = 's32[]', space=sflag, size = 0x4, offset = 0, fixed_abs, tag = 'sflag constant byte address 0x0 - dummy sync flag']
  #allocation22 [shape = 's32[]', space=sflag, size = 0x4, offset = 0, fixed_abs, tag = 'sflag constant byte address 0x0 - dummy sync flag']
  #allocation23 [shape = 's32[]', space=sflag, size = 0x4, offset = 0, fixed_abs, tag = 'sflag constant byte address 0x0 - dummy sync flag']
  #allocation24 [shape = 's32[]', space=sflag, size = 0x4, offset = 0, fixed_abs, tag = 'sflag constant byte address 0x0 - dummy sync flag']
  #allocation25 [shape = 's32[]', space=sflag, size = 0x4, offset = 0, fixed_abs, tag = 'sflag constant byte address 0x0 - dummy sync flag']
  #allocation26 [shape = 's32[]', space=sflag, size = 0x4, offset = 0, fixed_abs, tag = 'sflag constant byte address 0x0 - dummy sync flag']
  #allocation27 [shape = 's32[]', space=sflag, size = 0x4, offset = 0, fixed_abs, tag = 'sflag constant byte address 0x0 - dummy sync flag']
  #allocation28 [shape = 's32[]', space=sflag, size = 0x4, offset = 0, fixed_abs, tag = 'sflag constant byte address 0x0 - dummy sync flag']
  #allocation29 [shape = 's32[]', space=sflag, size = 0x4, offset = 0, fixed_abs, tag = 'sflag constant byte address 0x0 - dummy sync flag']
  #allocation30 [shape = 's32[]', space=sflag, size = 0x4, offset = 0, fixed_abs, tag = 'sflag constant byte address 0x0 - dummy sync flag']
  #allocation31 [shape = 's32[]', space=sflag, size = 0x4, offset = 0, fixed_abs, tag = 'sflag constant byte address 0x0 - dummy sync flag']
  #allocation32 [shape = 's32[]', space=sflag, size = 0x4, offset = 0, fixed_abs, tag = 'sflag constant byte address 0x0 - dummy sync flag']
  %s0 = inlined_call_operand.hbm [shape: s32[8], index: 0, kind: input, shape index: {}]
  %s1 = inlined_call_operand.hbm [shape: f32[64,128], index: 1, kind: input, shape index: {}]
  %s2 = inlined_call_operand.hbm [shape: f32[8,128], index: 2, kind: input, shape index: {}]
  %s3 = inlined_call_operand.hbm [shape: bf16[128,1536], index: 3, kind: input, shape index: {}]
  %s4 = inlined_call_operand.hbm [shape: f32[1,1536], index: 4, kind: input, shape index: {}]
  %s5 = inlined_call_operand.hbm [shape: bf16[4,128,128], index: 5, kind: input, shape index: {}]
  %s6 = inlined_call_operand.vmem [shape: f32[1,128], index: 6, kind: input, shape index: {}]
  %s7 = inlined_call_operand.hbm [shape: f32[8,128], index: 7, kind: output, shape index: {}]
  %s8 = sld [smem:[#allocation0]]
  $region86: #{tpu_custom_call.1} parent=0
    _
  %s10 = ssub.s32 1, %s8
  %s11 = scalar_select 0, %s10, %s8
  $region1: #{tpu_custom_call.1} parent=0
    #allocation4 [shape = 'u8[512]{0}', space=smem, size = 0x200, scoped, tag = 'input window, operand 0, single buffered']
    #allocation5 [shape = 's32[1]{0}', space=sflag, size = 0x4, scoped, tag = 'scoped memory for tpu_custom_call.1']
    #allocation6 [shape = 's32[1]{0}', space=sflag, size = 0x4, scoped, tag = 'scoped memory for tpu_custom_call.1']
    #allocation7 [shape = 's32[1]{0}', space=sflag, size = 0x4, scoped, tag = 'scoped memory for tpu_custom_call.1']
    #allocation8 [shape = 'u8[4096]{0}', space=vmem, size = 0x1000, scoped, tag = 'input window, operand 2, single buffered']
    #allocation9 [shape = 'u8[393216]{0}', space=vmem, size = 0x60000, scoped, tag = 'input window, operand 3, single buffered']
    #allocation10 [shape = 's32[1]{0}', space=sflag, size = 0x4, scoped, tag = 'scoped memory for tpu_custom_call.1']
    #allocation11 [shape = 'u8[6144]{0}', space=vmem, size = 0x1800, scoped, tag = 'input window, operand 4, single buffered']
    #allocation12 [shape = 'u8[131072]{0}', space=vmem, size = 0x20000, scoped, tag = 'input window, operand 5, single buffered']
    #allocation13 [shape = 's32[1]{0}', space=sflag, size = 0x4, scoped, tag = 'scoped memory for tpu_custom_call.1']
    #allocation14 [shape = 'u8[4096]{0}', space=vmem, size = 0x1000, scoped, tag = 'output window, operand 0, single buffered']
    %12 = vsyncpa [#allocation7], 0
    %13 = vsyncpa [#allocation5], 0
    %14 = vsyncpa [#allocation10], 0
    %15 = vsyncpa [#allocation13], 0
    %16 = vsyncpa [#allocation6], 0
    // Predicated region
    $region2: #{tpu_custom_call.1} parent=1 // pred_check
      _
    $region3: #{tpu_custom_call.1} parent=1 // pred_check_branch
      %18 = sbr.rel (0) target = $region5
    $region4: #{tpu_custom_call.1} parent=1 // pred_region
      %s20 = ssub.s32 16, 16
      %21 = vsyncadd [#allocation7], %s20
      %24 = dma.hbm_to_smem %s0, 16, [#allocation4], [#allocation7]
    $region5: #{tpu_custom_call.1} parent=1 // pred_fallthru
      _
    // Predicated region
    $region6: #{tpu_custom_call.1} parent=1 // pred_check
      _
    $region7: #{tpu_custom_call.1} parent=1 // pred_check_branch
      %26 = sbr.rel (0) target = $region9
    $region8: #{tpu_custom_call.1} parent=1 // pred_region
      %s28 = ssub.s32 128, 128
      %29 = vsyncadd [#allocation5], %s28
      %s31 = sshll.u32 [#allocation8], 4
      %s32 = int_to_ptr.vmem [resolvable:$true] %s31
      %34 = dma.hbm_to_vmem [thread:$0]  %s2, 128, %s32, [#allocation5]
    $region9: #{tpu_custom_call.1} parent=1 // pred_fallthru
      _
    // Predicated region
    $region10: #{tpu_custom_call.1} parent=1 // pred_check
      _
    $region11: #{tpu_custom_call.1} parent=1 // pred_check_branch
      %36 = sbr.rel (0) target = $region13
    $region12: #{tpu_custom_call.1} parent=1 // pred_region
      %s38 = ssub.s32 12288, 12288
      %39 = vsyncadd [#allocation10], %s38
      %s40 = sshll.u32 [#allocation9], 4
      %s41 = int_to_ptr.vmem [resolvable:$true] %s40
      %46 = dma.hbm_to_vmem [thread:$0]  %s3, 12288, %s41, [#allocation10], 768, 768, 48
    $region13: #{tpu_custom_call.1} parent=1 // pred_fallthru
      _
    // Predicated region
    $region14: #{tpu_custom_call.1} parent=1 // pred_check
      _
    $region15: #{tpu_custom_call.1} parent=1 // pred_check_branch
      %48 = sbr.rel (0) target = $region17
    $region16: #{tpu_custom_call.1} parent=1 // pred_region
      %s50 = ssub.s32 192, 192
      %51 = vsyncadd [#allocation10], %s50
      %s53 = sshll.u32 [#allocation11], 4
      %s54 = int_to_ptr.vmem [resolvable:$true] %s53
      %56 = dma.hbm_to_vmem [thread:$0]  %s4, 192, %s54, [#allocation10]
    $region17: #{tpu_custom_call.1} parent=1 // pred_fallthru
      _
    // Predicated region
    $region18: #{tpu_custom_call.1} parent=1 // pred_check
      _
    $region19: #{tpu_custom_call.1} parent=1 // pred_check_branch
      %58 = sbr.rel (0) target = $region21
    $region20: #{tpu_custom_call.1} parent=1 // pred_region
      %s60 = ssub.s32 4096, 4096
      %61 = vsyncadd [#allocation13], %s60
      %s62 = sshll.u32 [#allocation12], 4
      %s63 = int_to_ptr.vmem [resolvable:$true] %s62
      %68 = dma.hbm_to_vmem [thread:$0]  %s5, 4096, %s63, [#allocation13], 64, 64, 4
    $region21: #{tpu_custom_call.1} parent=1 // pred_fallthru
      _
    // Predicated region
    $region22: #{tpu_custom_call.1} parent=1 // pred_check
      _
    $region23: #{tpu_custom_call.1} parent=1 // pred_check_branch
      %70 = sbr.rel (0) target = $region25
    $region24: #{tpu_custom_call.1} parent=1 // pred_region
      _
    $region25: #{tpu_custom_call.1} parent=1 // pred_fallthru
      _
    // Predicated region
    $region26: #{tpu_custom_call.1} parent=1 // pred_check
      _
    $region27: #{tpu_custom_call.1} parent=1 // pred_check_branch
      %72 = sbr.rel (0) target = $region29
    $region28: #{tpu_custom_call.1} parent=1 // pred_region
      %73 = dma.done [#allocation7], 16
    $region29: #{tpu_custom_call.1} parent=1 // pred_fallthru
      _
    // Predicated region
    $region30: #{tpu_custom_call.1} parent=1 // pred_check
      _
    $region31: #{tpu_custom_call.1} parent=1 // pred_check_branch
      %75 = sbr.rel (0) target = $region33
    $region32: #{tpu_custom_call.1} parent=1 // pred_region
      %76 = dma.done [#allocation5], 128
    $region33: #{tpu_custom_call.1} parent=1 // pred_fallthru
      _
    // Predicated region
    $region34: #{tpu_custom_call.1} parent=1 // pred_check
      _
    $region35: #{tpu_custom_call.1} parent=1 // pred_check_branch
      %78 = sbr.rel (0) target = $region37
    $region36: #{tpu_custom_call.1} parent=1 // pred_region
      %79 = dma.done [#allocation10], 12288
    $region37: #{tpu_custom_call.1} parent=1 // pred_fallthru
      _
    // Predicated region
    $region38: #{tpu_custom_call.1} parent=1 // pred_check
      _
    $region39: #{tpu_custom_call.1} parent=1 // pred_check_branch
      %81 = sbr.rel (0) target = $region41
    $region40: #{tpu_custom_call.1} parent=1 // pred_region
      %82 = dma.done [#allocation10], 192
    $region41: #{tpu_custom_call.1} parent=1 // pred_fallthru
      _
    // Predicated region
    $region42: #{tpu_custom_call.1} parent=1 // pred_check
      _
    $region43: #{tpu_custom_call.1} parent=1 // pred_check_branch
      %84 = sbr.rel (0) target = $region45
    $region44: #{tpu_custom_call.1} parent=1 // pred_region
      %85 = dma.done [#allocation13], 4096
    $region45: #{tpu_custom_call.1} parent=1 // pred_fallthru
      _
    %86 = sfence
    %s88 = sld [smem:[#allocation4]]
    %s89 = smul.addr %s88, 16
    %s90 = scalar_lea.hbm %s1, %s89
    // Predicated region
    $region46: #{tpu_custom_call.1} parent=1 // pred_check
      _
    $region47: #{tpu_custom_call.1} parent=1 // pred_check_branch
      %92 = sbr.rel target = $region49
    $region48: #{tpu_custom_call.1} parent=1 // pred_region
      %93 = sst [smem:[#allocation17]] [#allocation16]
      %94 = sst [smem:[#allocation18]] [#allocation15]
    $region49: #{tpu_custom_call.1} parent=1 // pred_fallthru
      _
    %96 = shalt.err (0)
    %s98 = sshll.u32 [#allocation2], 4
    %s99 = int_to_ptr.vmem [resolvable:$true] %s98
    %101 = dma.hbm_to_vmem [thread:$0]  %s90, 16, %s99, [#allocation3]
    %s102 = sld [smem:[#allocation4 + $0x1]]
    %s103 = smul.addr %s102, 16
    %s104 = scalar_lea.hbm %s1, %s103
    %s105 = scalar_lea.vmem [#allocation2], 1
    %s106 = scalar_lea.sflag [#allocation3], 1
    // Predicated region
    $region50: #{tpu_custom_call.1} parent=1 // pred_check
      _
    $region51: #{tpu_custom_call.1} parent=1 // pred_check_branch
      %108 = sbr.rel target = $region53
    $region52: #{tpu_custom_call.1} parent=1 // pred_region
      %109 = sst [smem:[#allocation17]] [#allocation20]
      %110 = sst [smem:[#allocation18]] [#allocation19]
    $region53: #{tpu_custom_call.1} parent=1 // pred_fallthru
      _
    %112 = shalt.err (0)
    %s114 = sshll.u32 %s105, 4
    %s115 = int_to_ptr.vmem [resolvable:$true] %s114
    %117 = dma.hbm_to_vmem [thread:$0]  %s104, 16, %s115, %s106
    %s118 = sld [smem:[#allocation4 + $0x2]]
    %s119 = smul.addr %s118, 16
    %s120 = scalar_lea.hbm %s1, %s119
    %s121 = scalar_lea.vmem [#allocation2], 2
    %s122 = scalar_lea.sflag [#allocation3], 2
    // Predicated region
    $region54: #{tpu_custom_call.1} parent=1 // pred_check
      _
    $region55: #{tpu_custom_call.1} parent=1 // pred_check_branch
      %124 = sbr.rel target = $region57
    $region56: #{tpu_custom_call.1} parent=1 // pred_region
      %125 = sst [smem:[#allocation17]] [#allocation22]
      %126 = sst [smem:[#allocation18]] [#allocation21]
    $region57: #{tpu_custom_call.1} parent=1 // pred_fallthru
      _
    %128 = shalt.err (0)
    %s130 = sshll.u32 %s121, 4
    %s131 = int_to_ptr.vmem [resolvable:$true] %s130
    %133 = dma.hbm_to_vmem [thread:$0]  %s120, 16, %s131, %s122
    %s134 = sld [smem:[#allocation4 + $0x3]]
    %s135 = smul.addr %s134, 16
    %s136 = scalar_lea.hbm %s1, %s135
    %s137 = scalar_lea.vmem [#allocation2], 3
    %s138 = scalar_lea.sflag [#allocation3], 3
    // Predicated region
    $region58: #{tpu_custom_call.1} parent=1 // pred_check
      _
    $region59: #{tpu_custom_call.1} parent=1 // pred_check_branch
      %140 = sbr.rel target = $region61
    $region60: #{tpu_custom_call.1} parent=1 // pred_region
      %141 = sst [smem:[#allocation17]] [#allocation24]
      %142 = sst [smem:[#allocation18]] [#allocation23]
    $region61: #{tpu_custom_call.1} parent=1 // pred_fallthru
      _
    %144 = shalt.err (0)
    %s146 = sshll.u32 %s137, 4
    %s147 = int_to_ptr.vmem [resolvable:$true] %s146
    %149 = dma.hbm_to_vmem [thread:$0]  %s136, 16, %s147, %s138
    %s150 = sld [smem:[#allocation4 + $0x4]]
    %s151 = smul.addr %s150, 16
    %s152 = scalar_lea.hbm %s1, %s151
    %s153 = scalar_lea.vmem [#allocation2], 4
    %s154 = scalar_lea.sflag [#allocation3], 4
    // Predicated region
    $region62: #{tpu_custom_call.1} parent=1 // pred_check
      _
    $region63: #{tpu_custom_call.1} parent=1 // pred_check_branch
      %156 = sbr.rel target = $region65
    $region64: #{tpu_custom_call.1} parent=1 // pred_region
      %157 = sst [smem:[#allocation17]] [#allocation26]
      %158 = sst [smem:[#allocation18]] [#allocation25]
    $region65: #{tpu_custom_call.1} parent=1 // pred_fallthru
      _
    %160 = shalt.err (0)
    %s162 = sshll.u32 %s153, 4
    %s163 = int_to_ptr.vmem [resolvable:$true] %s162
    %165 = dma.hbm_to_vmem [thread:$0]  %s152, 16, %s163, %s154
    %s166 = sld [smem:[#allocation4 + $0x5]]
    %s167 = smul.addr %s166, 16
    %s168 = scalar_lea.hbm %s1, %s167
    %s169 = scalar_lea.vmem [#allocation2], 5
    %s170 = scalar_lea.sflag [#allocation3], 5
    // Predicated region
    $region66: #{tpu_custom_call.1} parent=1 // pred_check
      _
    $region67: #{tpu_custom_call.1} parent=1 // pred_check_branch
      %172 = sbr.rel target = $region69
    $region68: #{tpu_custom_call.1} parent=1 // pred_region
      %173 = sst [smem:[#allocation17]] [#allocation28]
      %174 = sst [smem:[#allocation18]] [#allocation27]
    $region69: #{tpu_custom_call.1} parent=1 // pred_fallthru
      _
    %176 = shalt.err (0)
    %s178 = sshll.u32 %s169, 4
    %s179 = int_to_ptr.vmem [resolvable:$true] %s178
    %181 = dma.hbm_to_vmem [thread:$0]  %s168, 16, %s179, %s170
    %s182 = sld [smem:[#allocation4 + $0x6]]
    %s183 = smul.addr %s182, 16
    %s184 = scalar_lea.hbm %s1, %s183
    %s185 = scalar_lea.vmem [#allocation2], 6
    %s186 = scalar_lea.sflag [#allocation3], 6
    // Predicated region
    $region70: #{tpu_custom_call.1} parent=1 // pred_check
      _
    $region71: #{tpu_custom_call.1} parent=1 // pred_check_branch
      %188 = sbr.rel target = $region73
    $region72: #{tpu_custom_call.1} parent=1 // pred_region
      %189 = sst [smem:[#allocation17]] [#allocation30]
      %190 = sst [smem:[#allocation18]] [#allocation29]
    $region73: #{tpu_custom_call.1} parent=1 // pred_fallthru
      _
    %192 = shalt.err (0)
    %s194 = sshll.u32 %s185, 4
    %s195 = int_to_ptr.vmem [resolvable:$true] %s194
    %197 = dma.hbm_to_vmem [thread:$0]  %s184, 16, %s195, %s186
    %s198 = sld [smem:[#allocation4 + $0x7]]
    %s199 = smul.addr %s198, 16
    %s200 = scalar_lea.hbm %s1, %s199
    %s201 = scalar_lea.vmem [#allocation2], 7
    %s202 = scalar_lea.sflag [#allocation3], 7
    // Predicated region
    $region74: #{tpu_custom_call.1} parent=1 // pred_check
      _
    $region75: #{tpu_custom_call.1} parent=1 // pred_check_branch
      %204 = sbr.rel target = $region77
    $region76: #{tpu_custom_call.1} parent=1 // pred_region
      %205 = sst [smem:[#allocation17]] [#allocation32]
      %206 = sst [smem:[#allocation18]] [#allocation31]
    $region77: #{tpu_custom_call.1} parent=1 // pred_fallthru
      _
    %208 = shalt.err (0)
    %s210 = sshll.u32 %s201, 4
    %s211 = int_to_ptr.vmem [resolvable:$true] %s210
    %213 = dma.hbm_to_vmem [thread:$0]  %s200, 16, %s211, %s202
    %s214 = smul.u32 1, 1
    %s215 = sshll.u32 %s214, 4
    %216 = dma.done [#allocation3], %s215
    %s217 = sshll.u32 %s214, 4
    %218 = dma.done %s106, %s217
    %s219 = sshll.u32 %s214, 4
    %220 = dma.done %s122, %s219
    %s221 = sshll.u32 %s214, 4
    %222 = dma.done %s138, %s221
    %s223 = sshll.u32 %s214, 4
    %224 = dma.done %s154, %s223
    %s225 = sshll.u32 %s214, 4
    %226 = dma.done %s170, %s225
    %s227 = sshll.u32 %s214, 4
    %228 = dma.done %s186, %s227
    %s229 = sshll.u32 %s214, 4
    %230 = dma.done %s202, %s229
    %v231 = vld [vmem:[#allocation2] sm:$0xff]
    %v232 = vld [vmem:[#allocation8] sm:$0xff]
    %v233 = vadd.f32 %v231, %v232
    %v234 = vpack.c.bf16 %v233, %v233
    %v235 = vld [vmem:[#allocation9] sm:$0xff]
    %v236 = vld [vmem:[#allocation9 + $0x8] sm:$0xff]
    %v237 = vld [vmem:[#allocation9 + $0x10] sm:$0xff]
    %v238 = vld [vmem:[#allocation9 + $0x18] sm:$0xff]
    %v239 = vld [vmem:[#allocation9 + $0x20] sm:$0xff]
    %v240 = vld [vmem:[#allocation9 + $0x28] sm:$0xff]
    %v241 = vld [vmem:[#allocation9 + $0x30] sm:$0xff]
    %v242 = vld [vmem:[#allocation9 + $0x38] sm:$0xff]
    %v243 = vld [vmem:[#allocation9 + $0x40] sm:$0xff]
    %v244 = vld [vmem:[#allocation9 + $0x48] sm:$0xff]
    %v245 = vld [vmem:[#allocation9 + $0x50] sm:$0xff]
    %v246 = vld [vmem:[#allocation9 + $0x58] sm:$0xff]
    %v247 = vld [vmem:[#allocation9 + $0x60] sm:$0xff]
    %v248 = vld [vmem:[#allocation9 + $0x68] sm:$0xff]
    %v249 = vld [vmem:[#allocation9 + $0x70] sm:$0xff]
    %v250 = vld [vmem:[#allocation9 + $0x78] sm:$0xff]
    %v251 = vld [vmem:[#allocation9 + $0x80] sm:$0xff]
    %v252 = vld [vmem:[#allocation9 + $0x88] sm:$0xff]
    %v253 = vld [vmem:[#allocation9 + $0x90] sm:$0xff]
    %v254 = vld [vmem:[#allocation9 + $0x98] sm:$0xff]
    %v255 = vld [vmem:[#allocation9 + $0xa0] sm:$0xff]
    %v256 = vld [vmem:[#allocation9 + $0xa8] sm:$0xff]
    %v257 = vld [vmem:[#allocation9 + $0xb0] sm:$0xff]
    %v258 = vld [vmem:[#allocation9 + $0xb8] sm:$0xff]
    %v259 = vld [vmem:[#allocation9 + $0xc0] sm:$0xff]
    %v260 = vld [vmem:[#allocation9 + $0xc8] sm:$0xff]
    %v261 = vld [vmem:[#allocation9 + $0xd0] sm:$0xff]
    %v262 = vld [vmem:[#allocation9 + $0xd8] sm:$0xff]
    %v263 = vld [vmem:[#allocation9 + $0xe0] sm:$0xff]
    %v264 = vld [vmem:[#allocation9 + $0xe8] sm:$0xff]
    %v265 = vld [vmem:[#allocation9 + $0xf0] sm:$0xff]
    %v266 = vld [vmem:[#allocation9 + $0xf8] sm:$0xff]
    %v267 = vld [vmem:[#allocation9 + $0x100] sm:$0xff]
    %v268 = vld [vmem:[#allocation9 + $0x108] sm:$0xff]
    %v269 = vld [vmem:[#allocation9 + $0x110] sm:$0xff]
    %v270 = vld [vmem:[#allocation9 + $0x118] sm:$0xff]
    %v271 = vld [vmem:[#allocation9 + $0x120] sm:$0xff]
    %v272 = vld [vmem:[#allocation9 + $0x128] sm:$0xff]
    %v273 = vld [vmem:[#allocation9 + $0x130] sm:$0xff]
    %v274 = vld [vmem:[#allocation9 + $0x138] sm:$0xff]
    %v275 = vld [vmem:[#allocation9 + $0x140] sm:$0xff]
    %v276 = vld [vmem:[#allocation9 + $0x148] sm:$0xff]
    %v277 = vld [vmem:[#allocation9 + $0x150] sm:$0xff]
    %v278 = vld [vmem:[#allocation9 + $0x158] sm:$0xff]
    %v279 = vld [vmem:[#allocation9 + $0x160] sm:$0xff]
    %v280 = vld [vmem:[#allocation9 + $0x168] sm:$0xff]
    %v281 = vld [vmem:[#allocation9 + $0x170] sm:$0xff]
    %v282 = vld [vmem:[#allocation9 + $0x178] sm:$0xff]
    %v283 = vld [vmem:[#allocation9 + $0x180] sm:$0xff]
    %v284 = vld [vmem:[#allocation9 + $0x188] sm:$0xff]
    %v285 = vld [vmem:[#allocation9 + $0x190] sm:$0xff]
    %v286 = vld [vmem:[#allocation9 + $0x198] sm:$0xff]
    %v287 = vld [vmem:[#allocation9 + $0x1a0] sm:$0xff]
    %v288 = vld [vmem:[#allocation9 + $0x1a8] sm:$0xff]
    %v289 = vld [vmem:[#allocation9 + $0x1b0] sm:$0xff]
    %v290 = vld [vmem:[#allocation9 + $0x1b8] sm:$0xff]
    %v291 = vld [vmem:[#allocation9 + $0x1c0] sm:$0xff]
    %v292 = vld [vmem:[#allocation9 + $0x1c8] sm:$0xff]
    %v293 = vld [vmem:[#allocation9 + $0x1d0] sm:$0xff]
    %v294 = vld [vmem:[#allocation9 + $0x1d8] sm:$0xff]
    %v295 = vld [vmem:[#allocation9 + $0x1e0] sm:$0xff]
    %v296 = vld [vmem:[#allocation9 + $0x1e8] sm:$0xff]
    %v297 = vld [vmem:[#allocation9 + $0x1f0] sm:$0xff]
    %v298 = vld [vmem:[#allocation9 + $0x1f8] sm:$0xff]
    %v299 = vld [vmem:[#allocation9 + $0x200] sm:$0xff]
    %v300 = vld [vmem:[#allocation9 + $0x208] sm:$0xff]
    %v301 = vld [vmem:[#allocation9 + $0x210] sm:$0xff]
    %v302 = vld [vmem:[#allocation9 + $0x218] sm:$0xff]
    %v303 = vld [vmem:[#allocation9 + $0x220] sm:$0xff]
    %v304 = vld [vmem:[#allocation9 + $0x228] sm:$0xff]
    %v305 = vld [vmem:[#allocation9 + $0x230] sm:$0xff]
    %v306 = vld [vmem:[#allocation9 + $0x238] sm:$0xff]
    %v307 = vld [vmem:[#allocation9 + $0x240] sm:$0xff]
    %v308 = vld [vmem:[#allocation9 + $0x248] sm:$0xff]
    %v309 = vld [vmem:[#allocation9 + $0x250] sm:$0xff]
    %v310 = vld [vmem:[#allocation9 + $0x258] sm:$0xff]
    %v311 = vld [vmem:[#allocation9 + $0x260] sm:$0xff]
    %v312 = vld [vmem:[#allocation9 + $0x268] sm:$0xff]
    %v313 = vld [vmem:[#allocation9 + $0x270] sm:$0xff]
    %v314 = vld [vmem:[#allocation9 + $0x278] sm:$0xff]
    %v315 = vld [vmem:[#allocation9 + $0x280] sm:$0xff]
    %v316 = vld [vmem:[#allocation9 + $0x288] sm:$0xff]
    %v317 = vld [vmem:[#allocation9 + $0x290] sm:$0xff]
    %v318 = vld [vmem:[#allocation9 + $0x298] sm:$0xff]
    %v319 = vld [vmem:[#allocation9 + $0x2a0] sm:$0xff]
    %v320 = vld [vmem:[#allocation9 + $0x2a8] sm:$0xff]
    %v321 = vld [vmem:[#allocation9 + $0x2b0] sm:$0xff]
    %v322 = vld [vmem:[#allocation9 + $0x2b8] sm:$0xff]
    %v323 = vld [vmem:[#allocation9 + $0x2c0] sm:$0xff]
    %v324 = vld [vmem:[#allocation9 + $0x2c8] sm:$0xff]
    %v325 = vld [vmem:[#allocation9 + $0x2d0] sm:$0xff]
    %v326 = vld [vmem:[#allocation9 + $0x2d8] sm:$0xff]
    %v327 = vld [vmem:[#allocation9 + $0x2e0] sm:$0xff]
    %v328 = vld [vmem:[#allocation9 + $0x2e8] sm:$0xff]
    %v329 = vld [vmem:[#allocation9 + $0x2f0] sm:$0xff]
    %v330 = vld [vmem:[#allocation9 + $0x2f8] sm:$0xff]
    %v331 = vld [vmem:[#allocation11] sm:$0xff]
    %v332 = vld [vmem:[#allocation11 + $0x8] sm:$0xf]
    %v335 = vlaneseq
    %v336 = vshrl.u32 %v335, 7
    %v337 = vsub.s32 0, %v336
    %v338 = vrot.slane %v331, %v337
    %v339 = vlaneseq
    %v340 = vshrl.u32 %v339, 7
    %v341 = vsub.s32 1, %v340
    %v342 = vrot.slane %v331, %v341
    %v343 = vlaneseq
    %v344 = vshrl.u32 %v343, 7
    %v345 = vsub.s32 2, %v344
    %v346 = vrot.slane %v331, %v345
    %v347 = vlaneseq
    %v348 = vshrl.u32 %v347, 7
    %v349 = vsub.s32 3, %v348
    %v350 = vrot.slane %v331, %v349
    %v351 = vlaneseq
    %v352 = vshrl.u32 %v351, 7
    %v353 = vsub.s32 4, %v352
    %v354 = vrot.slane %v331, %v353
    %v355 = vlaneseq
    %v356 = vshrl.u32 %v355, 7
    %v357 = vsub.s32 5, %v356
    %v358 = vrot.slane %v331, %v357
    %v359 = vlaneseq
    %v360 = vshrl.u32 %v359, 7
    %v361 = vsub.s32 6, %v360
    %v362 = vrot.slane %v331, %v361
    %v363 = vlaneseq
    %v364 = vshrl.u32 %v363, 7
    %v365 = vsub.s32 7, %v364
    %v366 = vrot.slane %v331, %v365
    %v367 = vlaneseq
    %v368 = vshrl.u32 %v367, 7
    %v369 = vsub.s32 0, %v368
    %v370 = vrot.slane %v332, %v369
    %v371 = vlaneseq
    %v372 = vshrl.u32 %v371, 7
    %v373 = vsub.s32 1, %v372
    %v374 = vrot.slane %v332, %v373
    %v375 = vlaneseq
    %v376 = vshrl.u32 %v375, 7
    %v377 = vsub.s32 2, %v376
    %v378 = vrot.slane %v332, %v377
    %v379 = vlaneseq
    %v380 = vshrl.u32 %v379, 7
    %v381 = vsub.s32 3, %v380
    %v382 = vrot.slane %v332, %v381
    %v491 = vunpack.c.l.b16 %v235
    %v492 = vunpack.c.h.b16 %v235
    %v493 = vunpack.c.l.b16 %v236
    %v494 = vunpack.c.h.b16 %v236
    %v495 = vunpack.c.l.b16 %v237
    %v496 = vunpack.c.h.b16 %v237
    %v497 = vunpack.c.l.b16 %v238
    %v498 = vunpack.c.h.b16 %v238
    %v499 = vunpack.c.l.b16 %v239
    %v500 = vunpack.c.h.b16 %v239
    %v501 = vunpack.c.l.b16 %v240
    %v502 = vunpack.c.h.b16 %v240
    %v503 = vunpack.c.l.b16 %v241
    %v504 = vunpack.c.h.b16 %v241
    %v505 = vunpack.c.l.b16 %v242
    %v506 = vunpack.c.h.b16 %v242
    %v507 = vunpack.c.l.b16 %v243
    %v508 = vunpack.c.h.b16 %v243
    %v509 = vunpack.c.l.b16 %v244
    %v510 = vunpack.c.h.b16 %v244
    %v511 = vunpack.c.l.b16 %v245
    %v512 = vunpack.c.h.b16 %v245
    %v513 = vunpack.c.l.b16 %v246
    %v514 = vunpack.c.h.b16 %v246
    %v515 = vunpack.c.l.b16 %v247
    %v516 = vunpack.c.h.b16 %v247
    %v517 = vunpack.c.l.b16 %v248
    %v518 = vunpack.c.h.b16 %v248
    %v519 = vunpack.c.l.b16 %v249
    %v520 = vunpack.c.h.b16 %v249
    %v521 = vunpack.c.l.b16 %v250
    %v522 = vunpack.c.h.b16 %v250
    %v523 = vunpack.c.l.b16 %v251
    %v524 = vunpack.c.h.b16 %v251
    %v525 = vunpack.c.l.b16 %v252
    %v526 = vunpack.c.h.b16 %v252
    %v527 = vunpack.c.l.b16 %v253
    %v528 = vunpack.c.h.b16 %v253
    %v529 = vunpack.c.l.b16 %v254
    %v530 = vunpack.c.h.b16 %v254
    %v531 = vunpack.c.l.b16 %v255
    %v532 = vunpack.c.h.b16 %v255
    %v533 = vunpack.c.l.b16 %v256
    %v534 = vunpack.c.h.b16 %v256
    %v535 = vunpack.c.l.b16 %v257
    %v536 = vunpack.c.h.b16 %v257
    %v537 = vunpack.c.l.b16 %v258
    %v538 = vunpack.c.h.b16 %v258
    %v539 = vunpack.c.l.b16 %v259
    %v540 = vunpack.c.h.b16 %v259
    %v541 = vunpack.c.l.b16 %v260
    %v542 = vunpack.c.h.b16 %v260
    %v543 = vunpack.c.l.b16 %v261
    %v544 = vunpack.c.h.b16 %v261
    %v545 = vunpack.c.l.b16 %v262
    %v546 = vunpack.c.h.b16 %v262
    %v547 = vunpack.c.l.b16 %v263
    %v548 = vunpack.c.h.b16 %v263
    %v549 = vunpack.c.l.b16 %v264
    %v550 = vunpack.c.h.b16 %v264
    %v551 = vunpack.c.l.b16 %v265
    %v552 = vunpack.c.h.b16 %v265
    %v553 = vunpack.c.l.b16 %v266
    %v554 = vunpack.c.h.b16 %v266
    %v555 = vunpack.c.l.b16 %v267
    %v556 = vunpack.c.h.b16 %v267
    %v557 = vunpack.c.l.b16 %v268
    %v558 = vunpack.c.h.b16 %v268
    %v559 = vunpack.c.l.b16 %v269
    %v560 = vunpack.c.h.b16 %v269
    %v561 = vunpack.c.l.b16 %v270
    %v562 = vunpack.c.h.b16 %v270
    %v563 = vunpack.c.l.b16 %v271
    %v564 = vunpack.c.h.b16 %v271
    %v565 = vunpack.c.l.b16 %v272
    %v566 = vunpack.c.h.b16 %v272
    %v567 = vunpack.c.l.b16 %v273
    %v568 = vunpack.c.h.b16 %v273
    %v569 = vunpack.c.l.b16 %v274
    %v570 = vunpack.c.h.b16 %v274
    %v571 = vunpack.c.l.b16 %v275
    %v572 = vunpack.c.h.b16 %v275
    %v573 = vunpack.c.l.b16 %v276
    %v574 = vunpack.c.h.b16 %v276
    %v575 = vunpack.c.l.b16 %v277
    %v576 = vunpack.c.h.b16 %v277
    %v577 = vunpack.c.l.b16 %v278
    %v578 = vunpack.c.h.b16 %v278
    %v579 = vunpack.c.l.b16 %v279
    %v580 = vunpack.c.h.b16 %v279
    %v581 = vunpack.c.l.b16 %v280
    %v582 = vunpack.c.h.b16 %v280
    %v583 = vunpack.c.l.b16 %v281
    %v584 = vunpack.c.h.b16 %v281
    %v585 = vunpack.c.l.b16 %v282
    %v586 = vunpack.c.h.b16 %v282
    %v587 = vunpack.c.l.b16 %v283
    %v588 = vunpack.c.h.b16 %v283
    %v589 = vunpack.c.l.b16 %v284
    %v590 = vunpack.c.h.b16 %v284
    %v591 = vunpack.c.l.b16 %v285
    %v592 = vunpack.c.h.b16 %v285
    %v593 = vunpack.c.l.b16 %v286
    %v594 = vunpack.c.h.b16 %v286
    %v595 = vunpack.c.l.b16 %v287
    %v596 = vunpack.c.h.b16 %v287
    %v597 = vunpack.c.l.b16 %v288
    %v598 = vunpack.c.h.b16 %v288
    %v599 = vunpack.c.l.b16 %v289
    %v600 = vunpack.c.h.b16 %v289
    %v601 = vunpack.c.l.b16 %v290
    %v602 = vunpack.c.h.b16 %v290
    %v603 = vunpack.c.l.b16 %v291
    %v604 = vunpack.c.h.b16 %v291
    %v605 = vunpack.c.l.b16 %v292
    %v606 = vunpack.c.h.b16 %v292
    %v607 = vunpack.c.l.b16 %v293
    %v608 = vunpack.c.h.b16 %v293
    %v609 = vunpack.c.l.b16 %v294
    %v610 = vunpack.c.h.b16 %v294
    %v611 = vunpack.c.l.b16 %v295
    %v612 = vunpack.c.h.b16 %v295
    %v613 = vunpack.c.l.b16 %v296
    %v614 = vunpack.c.h.b16 %v296
    %v615 = vunpack.c.l.b16 %v297
    %v616 = vunpack.c.h.b16 %v297
    %v617 = vunpack.c.l.b16 %v298
    %v618 = vunpack.c.h.b16 %v298
    %v619 = vunpack.c.l.b16 %v299
    %v620 = vunpack.c.h.b16 %v299
    %v621 = vunpack.c.l.b16 %v300
    %v622 = vunpack.c.h.b16 %v300
    %v623 = vunpack.c.l.b16 %v301
    %v624 = vunpack.c.h.b16 %v301
    %v625 = vunpack.c.l.b16 %v302
    %v626 = vunpack.c.h.b16 %v302
    %v627 = vunpack.c.l.b16 %v303
    %v628 = vunpack.c.h.b16 %v303
    %v629 = vunpack.c.l.b16 %v304
    %v630 = vunpack.c.h.b16 %v304
    %v631 = vunpack.c.l.b16 %v305
    %v632 = vunpack.c.h.b16 %v305
    %v633 = vunpack.c.l.b16 %v306
    %v634 = vunpack.c.h.b16 %v306
    %v635 = vunpack.c.l.b16 %v307
    %v636 = vunpack.c.h.b16 %v307
    %v637 = vunpack.c.l.b16 %v308
    %v638 = vunpack.c.h.b16 %v308
    %v639 = vunpack.c.l.b16 %v309
    %v640 = vunpack.c.h.b16 %v309
    %v641 = vunpack.c.l.b16 %v310
    %v642 = vunpack.c.h.b16 %v310
    %v643 = vunpack.c.l.b16 %v311
    %v644 = vunpack.c.h.b16 %v311
    %v645 = vunpack.c.l.b16 %v312
    %v646 = vunpack.c.h.b16 %v312
    %v647 = vunpack.c.l.b16 %v313
    %v648 = vunpack.c.h.b16 %v313
    %v649 = vunpack.c.l.b16 %v314
    %v650 = vunpack.c.h.b16 %v314
    %v651 = vunpack.c.l.b16 %v315
    %v652 = vunpack.c.h.b16 %v315
    %v653 = vunpack.c.l.b16 %v316
    %v654 = vunpack.c.h.b16 %v316
    %v655 = vunpack.c.l.b16 %v317
    %v656 = vunpack.c.h.b16 %v317
    %v657 = vunpack.c.l.b16 %v318
    %v658 = vunpack.c.h.b16 %v318
    %v659 = vunpack.c.l.b16 %v319
    %v660 = vunpack.c.h.b16 %v319
    %v661 = vunpack.c.l.b16 %v320
    %v662 = vunpack.c.h.b16 %v320
    %v663 = vunpack.c.l.b16 %v321
    %v664 = vunpack.c.h.b16 %v321
    %v665 = vunpack.c.l.b16 %v322
    %v666 = vunpack.c.h.b16 %v322
    %v667 = vunpack.c.l.b16 %v323
    %v668 = vunpack.c.h.b16 %v323
    %v669 = vunpack.c.l.b16 %v324
    %v670 = vunpack.c.h.b16 %v324
    %v671 = vunpack.c.l.b16 %v325
    %v672 = vunpack.c.h.b16 %v325
    %v673 = vunpack.c.l.b16 %v326
    %v674 = vunpack.c.h.b16 %v326
    %v675 = vunpack.c.l.b16 %v327
    %v676 = vunpack.c.h.b16 %v327
    %v677 = vunpack.c.l.b16 %v328
    %v678 = vunpack.c.h.b16 %v328
    %v679 = vunpack.c.l.b16 %v329
    %v680 = vunpack.c.h.b16 %v329
    %v681 = vunpack.c.l.b16 %v330
    %v682 = vunpack.c.h.b16 %v330
    %v683 = vpack.c.b16 %v503, %v491
    %v684 = vpack.c.b16 %v504, %v492
    %v685 = vpack.c.b16 %v505, %v493
    %v686 = vpack.c.b16 %v506, %v494
    %v687 = vpack.c.b16 %v507, %v495
    %v688 = vpack.c.b16 %v508, %v496
    %v689 = vpack.c.b16 %v509, %v497
    %v690 = vpack.c.b16 %v510, %v498
    %v691 = vpack.c.b16 %v511, %v499
    %v692 = vpack.c.b16 %v512, %v500
    %v693 = vpack.c.b16 %v513, %v501
    %v694 = vpack.c.b16 %v514, %v502
    %v695 = vpack.c.b16 %v527, %v515
    %v696 = vpack.c.b16 %v528, %v516
    %v697 = vpack.c.b16 %v529, %v517
    %v698 = vpack.c.b16 %v530, %v518
    %v699 = vpack.c.b16 %v531, %v519
    %v700 = vpack.c.b16 %v532, %v520
    %v701 = vpack.c.b16 %v533, %v521
    %v702 = vpack.c.b16 %v534, %v522
    %v703 = vpack.c.b16 %v535, %v523
    %v704 = vpack.c.b16 %v536, %v524
    %v705 = vpack.c.b16 %v537, %v525
    %v706 = vpack.c.b16 %v538, %v526
    %v707 = vpack.c.b16 %v551, %v539
    %v708 = vpack.c.b16 %v552, %v540
    %v709 = vpack.c.b16 %v553, %v541
    %v710 = vpack.c.b16 %v554, %v542
    %v711 = vpack.c.b16 %v555, %v543
    %v712 = vpack.c.b16 %v556, %v544
    %v713 = vpack.c.b16 %v557, %v545
    %v714 = vpack.c.b16 %v558, %v546
    %v715 = vpack.c.b16 %v559, %v547
    %v716 = vpack.c.b16 %v560, %v548
    %v717 = vpack.c.b16 %v561, %v549
    %v718 = vpack.c.b16 %v562, %v550
    %v719 = vpack.c.b16 %v575, %v563
    %v720 = vpack.c.b16 %v576, %v564
    %v721 = vpack.c.b16 %v577, %v565
    %v722 = vpack.c.b16 %v578, %v566
    %v723 = vpack.c.b16 %v579, %v567
    %v724 = vpack.c.b16 %v580, %v568
    %v725 = vpack.c.b16 %v581, %v569
    %v726 = vpack.c.b16 %v582, %v570
    %v727 = vpack.c.b16 %v583, %v571
    %v728 = vpack.c.b16 %v584, %v572
    %v729 = vpack.c.b16 %v585, %v573
    %v730 = vpack.c.b16 %v586, %v574
    %v731 = vpack.c.b16 %v599, %v587
    %v732 = vpack.c.b16 %v600, %v588
    %v733 = vpack.c.b16 %v601, %v589
    %v734 = vpack.c.b16 %v602, %v590
    %v735 = vpack.c.b16 %v603, %v591
    %v736 = vpack.c.b16 %v604, %v592
    %v737 = vpack.c.b16 %v605, %v593
    %v738 = vpack.c.b16 %v606, %v594
    %v739 = vpack.c.b16 %v607, %v595
    %v740 = vpack.c.b16 %v608, %v596
    %v741 = vpack.c.b16 %v609, %v597
    %v742 = vpack.c.b16 %v610, %v598
    %v743 = vpack.c.b16 %v623, %v611
    %v744 = vpack.c.b16 %v624, %v612
    %v745 = vpack.c.b16 %v625, %v613
    %v746 = vpack.c.b16 %v626, %v614
    %v747 = vpack.c.b16 %v627, %v615
    %v748 = vpack.c.b16 %v628, %v616
    %v749 = vpack.c.b16 %v629, %v617
    %v750 = vpack.c.b16 %v630, %v618
    %v751 = vpack.c.b16 %v631, %v619
    %v752 = vpack.c.b16 %v632, %v620
    %v753 = vpack.c.b16 %v633, %v621
    %v754 = vpack.c.b16 %v634, %v622
    %v755 = vpack.c.b16 %v647, %v635
    %v756 = vpack.c.b16 %v648, %v636
    %v757 = vpack.c.b16 %v649, %v637
    %v758 = vpack.c.b16 %v650, %v638
    %v759 = vpack.c.b16 %v651, %v639
    %v760 = vpack.c.b16 %v652, %v640
    %v761 = vpack.c.b16 %v653, %v641
    %v762 = vpack.c.b16 %v654, %v642
    %v763 = vpack.c.b16 %v655, %v643
    %v764 = vpack.c.b16 %v656, %v644
    %v765 = vpack.c.b16 %v657, %v645
    %v766 = vpack.c.b16 %v658, %v646
    %v767 = vpack.c.b16 %v671, %v659
    %v768 = vpack.c.b16 %v672, %v660
    %v769 = vpack.c.b16 %v673, %v661
    %v770 = vpack.c.b16 %v674, %v662
    %v771 = vpack.c.b16 %v675, %v663
    %v772 = vpack.c.b16 %v676, %v664
    %v773 = vpack.c.b16 %v677, %v665
    %v774 = vpack.c.b16 %v678, %v666
    %v775 = vpack.c.b16 %v679, %v667
    %v776 = vpack.c.b16 %v680, %v668
    %v777 = vpack.c.b16 %v681, %v669
    %v778 = vpack.c.b16 %v682, %v670
    %875 = vmatprep.subr.bf16.mxu0 %v768
    %876 = vmatpush1.bf16.msra.mxu0 %v767
    %877 = vmatprep.subr.bf16.mxu0 %v756
    %878 = vmatpush1.bf16.msra.mxu0 %v755
    %879 = vmatprep.subr.bf16.mxu0 %v744
    %880 = vmatpush1.bf16.msra.mxu0 %v743
    %881 = vmatprep.subr.bf16.mxu0 %v732
    %882 = vmatpush1.bf16.msra.mxu0 %v731
    %883 = vmatprep.subr.bf16.mxu0 %v720
    %884 = vmatpush1.bf16.msra.mxu0 %v719
    %885 = vmatprep.subr.bf16.mxu0 %v708
    %886 = vmatpush1.bf16.msra.mxu0 %v707
    %887 = vmatprep.subr.bf16.mxu0 %v696
    %888 = vmatpush1.bf16.msra.mxu0 %v695
    %889 = vmatprep.subr.bf16.mxu0 %v684
    %890 = vmatpush1.bf16.msra.mxu0 %v683
    %891 = vmatprep.subr.bf16.mxu0 0
    %892 = vmatpush2.bf16.msra.mxu0 0
    %893 = vmatprep.subr.bf16.mxu0 0
    %894 = vmatpush2.bf16.msra.mxu0 0
    %895 = vmatprep.subr.bf16.mxu0 0
    %896 = vmatpush2.bf16.msra.mxu0 0
    %897 = vmatprep.subr.bf16.mxu0 0
    %898 = vmatpush2.bf16.msra.mxu0 0
    %899 = vmatprep.subr.bf16.mxu0 0
    %900 = vmatpush2.bf16.msra.mxu0 0
    %901 = vmatprep.subr.bf16.mxu0 0
    %902 = vmatpush2.bf16.msra.mxu0 0
    %903 = vmatprep.subr.bf16.mxu0 0
    %904 = vmatpush2.bf16.msra.mxu0 0
    %905 = vmatprep.subr.bf16.mxu0 0
    %906 = vmatpush2.bf16.msra.mxu0 0
    %907 = vmatprep.mubr.bf16.mxu0 0
    %908 = vmatmul.mubr.bf16.gmra.mxu0 %v234
    %v909 = vpop.f32.mrf.mxu0
    %v910 = vadd.f32 %v338, %v909
    %v911 = vpop.f32.mrf.mxu0
    %v912 = vadd.f32 %v342, %v911
    %v913 = vpop.f32.mrf.mxu0
    %v914 = vpop.f32.mrf.mxu0
    %915 = vdwg.mxu0
    %916 = vmatprep.subr.bf16.mxu0 %v770
    %917 = vmatpush1.bf16.msra.mxu0 %v769
    %918 = vmatprep.subr.bf16.mxu0 %v758
    %919 = vmatpush1.bf16.msra.mxu0 %v757
    %920 = vmatprep.subr.bf16.mxu0 %v746
    %921 = vmatpush1.bf16.msra.mxu0 %v745
    %922 = vmatprep.subr.bf16.mxu0 %v734
    %923 = vmatpush1.bf16.msra.mxu0 %v733
    %924 = vmatprep.subr.bf16.mxu0 %v722
    %925 = vmatpush1.bf16.msra.mxu0 %v721
    %926 = vmatprep.subr.bf16.mxu0 %v710
    %927 = vmatpush1.bf16.msra.mxu0 %v709
    %928 = vmatprep.subr.bf16.mxu0 %v698
    %929 = vmatpush1.bf16.msra.mxu0 %v697
    %930 = vmatprep.subr.bf16.mxu0 %v686
    %931 = vmatpush1.bf16.msra.mxu0 %v685
    %932 = vmatprep.subr.bf16.mxu0 0
    %933 = vmatpush2.bf16.msra.mxu0 0
    %934 = vmatprep.subr.bf16.mxu0 0
    %935 = vmatpush2.bf16.msra.mxu0 0
    %936 = vmatprep.subr.bf16.mxu0 0
    %937 = vmatpush2.bf16.msra.mxu0 0
    %938 = vmatprep.subr.bf16.mxu0 0
    %939 = vmatpush2.bf16.msra.mxu0 0
    %940 = vmatprep.subr.bf16.mxu0 0
    %941 = vmatpush2.bf16.msra.mxu0 0
    %942 = vmatprep.subr.bf16.mxu0 0
    %943 = vmatpush2.bf16.msra.mxu0 0
    %944 = vmatprep.subr.bf16.mxu0 0
    %945 = vmatpush2.bf16.msra.mxu0 0
    %946 = vmatprep.subr.bf16.mxu0 0
    %947 = vmatpush2.bf16.msra.mxu0 0
    %948 = vmatprep.mubr.bf16.mxu0 0
    %949 = vmatmul.mubr.bf16.gmra.mxu0 %v234
    %v950 = vpop.f32.mrf.mxu0
    %v951 = vadd.f32 %v346, %v950
    %v952 = vpop.f32.mrf.mxu0
    %v953 = vadd.f32 %v350, %v952
    %v954 = vpop.f32.mrf.mxu0
    %v955 = vpop.f32.mrf.mxu0
    %956 = vdwg.mxu0
    %957 = vmatprep.subr.bf16.mxu0 %v772
    %958 = vmatpush1.bf16.msra.mxu0 %v771
    %959 = vmatprep.subr.bf16.mxu0 %v760
    %960 = vmatpush1.bf16.msra.mxu0 %v759
    %961 = vmatprep.subr.bf16.mxu0 %v748
    %962 = vmatpush1.bf16.msra.mxu0 %v747
    %963 = vmatprep.subr.bf16.mxu0 %v736
    %964 = vmatpush1.bf16.msra.mxu0 %v735
    %965 = vmatprep.subr.bf16.mxu0 %v724
    %966 = vmatpush1.bf16.msra.mxu0 %v723
    %967 = vmatprep.subr.bf16.mxu0 %v712
    %968 = vmatpush1.bf16.msra.mxu0 %v711
    %969 = vmatprep.subr.bf16.mxu0 %v700
    %970 = vmatpush1.bf16.msra.mxu0 %v699
    %971 = vmatprep.subr.bf16.mxu0 %v688
    %972 = vmatpush1.bf16.msra.mxu0 %v687
    %973 = vmatprep.subr.bf16.mxu0 0
    %974 = vmatpush2.bf16.msra.mxu0 0
    %975 = vmatprep.subr.bf16.mxu0 0
    %976 = vmatpush2.bf16.msra.mxu0 0
    %977 = vmatprep.subr.bf16.mxu0 0
    %978 = vmatpush2.bf16.msra.mxu0 0
    %979 = vmatprep.subr.bf16.mxu0 0
    %980 = vmatpush2.bf16.msra.mxu0 0
    %981 = vmatprep.subr.bf16.mxu0 0
    %982 = vmatpush2.bf16.msra.mxu0 0
    %983 = vmatprep.subr.bf16.mxu0 0
    %984 = vmatpush2.bf16.msra.mxu0 0
    %985 = vmatprep.subr.bf16.mxu0 0
    %986 = vmatpush2.bf16.msra.mxu0 0
    %987 = vmatprep.subr.bf16.mxu0 0
    %988 = vmatpush2.bf16.msra.mxu0 0
    %989 = vmatprep.mubr.bf16.mxu0 0
    %990 = vmatmul.mubr.bf16.gmra.mxu0 %v234
    %v991 = vpop.f32.mrf.mxu0
    %v992 = vadd.f32 %v354, %v991
    %v993 = vpop.f32.mrf.mxu0
    %v994 = vadd.f32 %v358, %v993
    %v995 = vpop.f32.mrf.mxu0
    %v996 = vpop.f32.mrf.mxu0
    %997 = vdwg.mxu0
    %998 = vmatprep.subr.bf16.mxu0 %v774
    %999 = vmatpush1.bf16.msra.mxu0 %v773
    %1000 = vmatprep.subr.bf16.mxu0 %v762
    %1001 = vmatpush1.bf16.msra.mxu0 %v761
    %1002 = vmatprep.subr.bf16.mxu0 %v750
    %1003 = vmatpush1.bf16.msra.mxu0 %v749
    %1004 = vmatprep.subr.bf16.mxu0 %v738
    %1005 = vmatpush1.bf16.msra.mxu0 %v737
    %1006 = vmatprep.subr.bf16.mxu0 %v726
    %1007 = vmatpush1.bf16.msra.mxu0 %v725
    %1008 = vmatprep.subr.bf16.mxu0 %v714
    %1009 = vmatpush1.bf16.msra.mxu0 %v713
    %1010 = vmatprep.subr.bf16.mxu0 %v702
    %1011 = vmatpush1.bf16.msra.mxu0 %v701
    %1012 = vmatprep.subr.bf16.mxu0 %v690
    %1013 = vmatpush1.bf16.msra.mxu0 %v689
    %1014 = vmatprep.subr.bf16.mxu0 0
    %1015 = vmatpush2.bf16.msra.mxu0 0
    %1016 = vmatprep.subr.bf16.mxu0 0
    %1017 = vmatpush2.bf16.msra.mxu0 0
    %1018 = vmatprep.subr.bf16.mxu0 0
    %1019 = vmatpush2.bf16.msra.mxu0 0
    %1020 = vmatprep.subr.bf16.mxu0 0
    %1021 = vmatpush2.bf16.msra.mxu0 0
    %1022 = vmatprep.subr.bf16.mxu0 0
    %1023 = vmatpush2.bf16.msra.mxu0 0
    %1024 = vmatprep.subr.bf16.mxu0 0
    %1025 = vmatpush2.bf16.msra.mxu0 0
    %1026 = vmatprep.subr.bf16.mxu0 0
    %1027 = vmatpush2.bf16.msra.mxu0 0
    %1028 = vmatprep.subr.bf16.mxu0 0
    %1029 = vmatpush2.bf16.msra.mxu0 0
    %1030 = vmatprep.mubr.bf16.mxu0 0
    %1031 = vmatmul.mubr.bf16.gmra.mxu0 %v234
    %v1032 = vpop.f32.mrf.mxu0
    %v1033 = vadd.f32 %v362, %v1032
    %v1034 = vpop.f32.mrf.mxu0
    %v1035 = vadd.f32 %v366, %v1034
    %v1036 = vpop.f32.mrf.mxu0
    %v1037 = vpop.f32.mrf.mxu0
    %1038 = vdwg.mxu0
    %1039 = vmatprep.subr.bf16.mxu0 %v776
    %1040 = vmatpush1.bf16.msra.mxu0 %v775
    %1041 = vmatprep.subr.bf16.mxu0 %v764
    %1042 = vmatpush1.bf16.msra.mxu0 %v763
    %1043 = vmatprep.subr.bf16.mxu0 %v752
    %1044 = vmatpush1.bf16.msra.mxu0 %v751
    %1045 = vmatprep.subr.bf16.mxu0 %v740
    %1046 = vmatpush1.bf16.msra.mxu0 %v739
    %1047 = vmatprep.subr.bf16.mxu0 %v728
    %1048 = vmatpush1.bf16.msra.mxu0 %v727
    %1049 = vmatprep.subr.bf16.mxu0 %v716
    %1050 = vmatpush1.bf16.msra.mxu0 %v715
    %1051 = vmatprep.subr.bf16.mxu0 %v704
    %1052 = vmatpush1.bf16.msra.mxu0 %v703
    %1053 = vmatprep.subr.bf16.mxu0 %v692
    %1054 = vmatpush1.bf16.msra.mxu0 %v691
    %1055 = vmatprep.subr.bf16.mxu0 0
    %1056 = vmatpush2.bf16.msra.mxu0 0
    %1057 = vmatprep.subr.bf16.mxu0 0
    %1058 = vmatpush2.bf16.msra.mxu0 0
    %1059 = vmatprep.subr.bf16.mxu0 0
    %1060 = vmatpush2.bf16.msra.mxu0 0
    %1061 = vmatprep.subr.bf16.mxu0 0
    %1062 = vmatpush2.bf16.msra.mxu0 0
    %1063 = vmatprep.subr.bf16.mxu0 0
    %1064 = vmatpush2.bf16.msra.mxu0 0
    %1065 = vmatprep.subr.bf16.mxu0 0
    %1066 = vmatpush2.bf16.msra.mxu0 0
    %1067 = vmatprep.subr.bf16.mxu0 0
    %1068 = vmatpush2.bf16.msra.mxu0 0
    %1069 = vmatprep.subr.bf16.mxu0 0
    %1070 = vmatpush2.bf16.msra.mxu0 0
    %1071 = vmatprep.mubr.bf16.mxu0 0
    %1072 = vmatmul.mubr.bf16.gmra.mxu0 %v234
    %v1073 = vpop.f32.mrf.mxu0
    %v1074 = vadd.f32 %v370, %v1073
    %v1075 = vpop.f32.mrf.mxu0
    %v1076 = vadd.f32 %v374, %v1075
    %v1077 = vpop.f32.mrf.mxu0
    %v1078 = vpop.f32.mrf.mxu0
    %1079 = vdwg.mxu0
    %1080 = vmatprep.subr.bf16.mxu0 %v778
    %1081 = vmatpush1.bf16.msra.mxu0 %v777
    %1082 = vmatprep.subr.bf16.mxu0 %v766
    %1083 = vmatpush1.bf16.msra.mxu0 %v765
    %1084 = vmatprep.subr.bf16.mxu0 %v754
    %1085 = vmatpush1.bf16.msra.mxu0 %v753
    %1086 = vmatprep.subr.bf16.mxu0 %v742
    %1087 = vmatpush1.bf16.msra.mxu0 %v741
    %1088 = vmatprep.subr.bf16.mxu0 %v730
    %1089 = vmatpush1.bf16.msra.mxu0 %v729
    %1090 = vmatprep.subr.bf16.mxu0 %v718
    %1091 = vmatpush1.bf16.msra.mxu0 %v717
    %1092 = vmatprep.subr.bf16.mxu0 %v706
    %1093 = vmatpush1.bf16.msra.mxu0 %v705
    %1094 = vmatprep.subr.bf16.mxu0 %v694
    %1095 = vmatpush1.bf16.msra.mxu0 %v693
    %1096 = vmatprep.subr.bf16.mxu0 0
    %1097 = vmatpush2.bf16.msra.mxu0 0
    %1098 = vmatprep.subr.bf16.mxu0 0
    %1099 = vmatpush2.bf16.msra.mxu0 0
    %1100 = vmatprep.subr.bf16.mxu0 0
    %1101 = vmatpush2.bf16.msra.mxu0 0
    %1102 = vmatprep.subr.bf16.mxu0 0
    %1103 = vmatpush2.bf16.msra.mxu0 0
    %1104 = vmatprep.subr.bf16.mxu0 0
    %1105 = vmatpush2.bf16.msra.mxu0 0
    %1106 = vmatprep.subr.bf16.mxu0 0
    %1107 = vmatpush2.bf16.msra.mxu0 0
    %1108 = vmatprep.subr.bf16.mxu0 0
    %1109 = vmatpush2.bf16.msra.mxu0 0
    %1110 = vmatprep.subr.bf16.mxu0 0
    %1111 = vmatpush2.bf16.msra.mxu0 0
    %1112 = vmatprep.mubr.bf16.mxu0 0
    %1113 = vmatmul.mubr.bf16.gmra.mxu0 %v234
    %v1114 = vpop.f32.mrf.mxu0
    %v1115 = vadd.f32 %v378, %v1114
    %v1116 = vpop.f32.mrf.mxu0
    %v1117 = vadd.f32 %v382, %v1116
    %v1118 = vpop.f32.mrf.mxu0
    %v1119 = vpop.f32.mrf.mxu0
    %1120 = vdwg.mxu0
    %v1121 = vlaneseq
    %v1122 = vshrl.u32 %v1121, 7
    %v1123 = vlaneseq
    %v1124 = vand.u32 %v1123, 127
    %vm1125 = vcmp.gt.s32.totalorder %v1124, %v1122
    %v1126 = vsel %vm1125, -1e+30, 0.0
    %v1127 = vpack.c.bf16 %v910, %v910
    %v1128 = vpack.c.bf16 %v992, %v992
    %v1129 = vpack.c.bf16 %v1074, %v1074
    %1130 = vmatprep.subr.bf16.mxu0 0
    %1131 = vmatpush1.bf16.xpose.msra.mxu0 0
    %1132 = vmatprep.subr.bf16.mxu0 0
    %1133 = vmatpush1.bf16.xpose.msra.mxu0 0
    %1134 = vmatprep.subr.bf16.mxu0 0
    %1135 = vmatpush1.bf16.xpose.msra.mxu0 0
    %1136 = vmatprep.subr.bf16.mxu0 0
    %1137 = vmatpush1.bf16.xpose.msra.mxu0 0
    %1138 = vmatprep.subr.bf16.mxu0 0
    %1139 = vmatpush1.bf16.xpose.msra.mxu0 0
    %1140 = vmatprep.subr.bf16.mxu0 0
    %1141 = vmatpush1.bf16.xpose.msra.mxu0 0
    %1142 = vmatprep.subr.bf16.mxu0 0
    %1143 = vmatpush1.bf16.xpose.msra.mxu0 0
    %1144 = vmatprep.subr.bf16.mxu0 0
    %1145 = vmatpush1.bf16.xpose.msra.mxu0 %v1128
    %1146 = vmatprep.subr.bf16.mxu0 0
    %1147 = vmatpush2.bf16.xpose.msra.mxu0 0
    %1148 = vmatprep.subr.bf16.mxu0 0
    %1149 = vmatpush2.bf16.xpose.msra.mxu0 0
    %1150 = vmatprep.subr.bf16.mxu0 0
    %1151 = vmatpush2.bf16.xpose.msra.mxu0 0
    %1152 = vmatprep.subr.bf16.mxu0 0
    %1153 = vmatpush2.bf16.xpose.msra.mxu0 0
    %1154 = vmatprep.subr.bf16.mxu0 0
    %1155 = vmatpush2.bf16.xpose.msra.mxu0 0
    %1156 = vmatprep.subr.bf16.mxu0 0
    %1157 = vmatpush2.bf16.xpose.msra.mxu0 0
    %1158 = vmatprep.subr.bf16.mxu0 0
    %1159 = vmatpush2.bf16.xpose.msra.mxu0 0
    %1160 = vmatprep.subr.bf16.mxu0 0
    %1161 = vmatpush2.bf16.xpose.msra.mxu0 0
    %1162 = vmatprep.mubr.bf16.mxu0 0
    %1163 = vmatmul.mubr.bf16.gmra.mxu0 %v1127
    %v1164 = vpop.f32.mrf.mxu0
    %v1165 = vadd.f32 0.0, %v1164
    %v1166 = vpop.f32.mrf.mxu0
    %v1167 = vpop.f32.mrf.mxu0
    %v1168 = vpop.f32.mrf.mxu0
    %1169 = vdwg.mxu0
    %v1170 = vmul.f32 %v1165, 0.35355338
    %v1171 = vadd.f32 %v1170, %v1126
    %vm1172 = vcmask 64512
    %v1173 = vsel %vm1172, %v1171, -inf
    %1174 = vmax.xlane.f32.xlu0 %v1173
    %v1175 = vpop.xlane.xlu0 %1174
    %v1176 = vsub.f32 %v1171, %v1175
    %v1177 = vmul.f32 %v1176, 1.442695
    %v1178 = vpow.pop %v1177
    %v1179 = vsel %vm1172, %v1178, 0.0
    %1180 = vadd.xlane.f32.xlu0 %v1179
    %v1181 = vpop.xlane.xlu0 %1180
    %v1182 = vrcp.pop %v1181
    %v1183 = vmul.f32 %v1178, %v1182
    %v1184 = vpack.c.bf16 %v1183, %v1183
    %v1186 = vsel %vm1172, %v1184, 0
    %vm1188 = vcmask 1043456
    %v1190 = vsel %vm1188, %v1129, 0
    %1192 = vmatprep.subr.bf16.mxu0 0
    %1193 = vmatpush1.bf16.msra.mxu0 0
    %1194 = vmatprep.subr.bf16.mxu0 0
    %1195 = vmatpush1.bf16.msra.mxu0 0
    %1196 = vmatprep.subr.bf16.mxu0 0
    %1197 = vmatpush1.bf16.msra.mxu0 0
    %1198 = vmatprep.subr.bf16.mxu0 0
    %1199 = vmatpush1.bf16.msra.mxu0 0
    %1200 = vmatprep.subr.bf16.mxu0 0
    %1201 = vmatpush1.bf16.msra.mxu0 0
    %1202 = vmatprep.subr.bf16.mxu0 0
    %1203 = vmatpush1.bf16.msra.mxu0 0
    %1204 = vmatprep.subr.bf16.mxu0 0
    %1205 = vmatpush1.bf16.msra.mxu0 0
    %1206 = vmatprep.subr.bf16.mxu0 0
    %1207 = vmatpush1.bf16.msra.mxu0 %v1190
    %1208 = vmatprep.subr.bf16.mxu0 0
    %1209 = vmatpush2.bf16.msra.mxu0 0
    %1210 = vmatprep.subr.bf16.mxu0 0
    %1211 = vmatpush2.bf16.msra.mxu0 0
    %1212 = vmatprep.subr.bf16.mxu0 0
    %1213 = vmatpush2.bf16.msra.mxu0 0
    %1214 = vmatprep.subr.bf16.mxu0 0
    %1215 = vmatpush2.bf16.msra.mxu0 0
    %1216 = vmatprep.subr.bf16.mxu0 0
    %1217 = vmatpush2.bf16.msra.mxu0 0
    %1218 = vmatprep.subr.bf16.mxu0 0
    %1219 = vmatpush2.bf16.msra.mxu0 0
    %1220 = vmatprep.subr.bf16.mxu0 0
    %1221 = vmatpush2.bf16.msra.mxu0 0
    %1222 = vmatprep.subr.bf16.mxu0 0
    %1223 = vmatpush2.bf16.msra.mxu0 0
    %1224 = vmatprep.mubr.bf16.mxu0 0
    %1225 = vmatmul.mubr.bf16.gmra.mxu0 %v1186
    %v1226 = vpop.f32.mrf.mxu0
    %v1227 = vadd.f32 0.0, %v1226
    %v1228 = vpop.f32.mrf.mxu0
    %v1229 = vpop.f32.mrf.mxu0
    %v1230 = vpop.f32.mrf.mxu0
    %1231 = vdwg.mxu0
    %v1232 = vpack.c.bf16 %v1227, %v1227
    %v1233 = vld [vmem:[#allocation12] sm:$0xf]
    %v1234 = vld [vmem:[#allocation12 + $0x4] sm:$0xf]
    %v1235 = vld [vmem:[#allocation12 + $0x8] sm:$0xf]
    %v1236 = vld [vmem:[#allocation12 + $0xc] sm:$0xf]
    %v1237 = vld [vmem:[#allocation12 + $0x10] sm:$0xf]
    %v1238 = vld [vmem:[#allocation12 + $0x14] sm:$0xf]
    %v1239 = vld [vmem:[#allocation12 + $0x18] sm:$0xf]
    %v1240 = vld [vmem:[#allocation12 + $0x1c] sm:$0xf]
    %v1241 = vld [vmem:[#allocation12 + $0x20] sm:$0xf]
    %v1242 = vld [vmem:[#allocation12 + $0x24] sm:$0xf]
    %v1243 = vld [vmem:[#allocation12 + $0x28] sm:$0xf]
    %v1244 = vld [vmem:[#allocation12 + $0x2c] sm:$0xf]
    %v1245 = vld [vmem:[#allocation12 + $0x30] sm:$0xf]
    %v1246 = vld [vmem:[#allocation12 + $0x34] sm:$0xf]
    %v1247 = vld [vmem:[#allocation12 + $0x38] sm:$0xf]
    %v1248 = vld [vmem:[#allocation12 + $0x3c] sm:$0xf]
    %v1249 = vpack.c.bf16 %v912, %v912
    %v1250 = vpack.c.bf16 %v994, %v994
    %v1251 = vpack.c.bf16 %v1076, %v1076
    %1252 = vmatprep.subr.bf16.mxu0 0
    %1253 = vmatpush1.bf16.xpose.msra.mxu0 0
    %1254 = vmatprep.subr.bf16.mxu0 0
    %1255 = vmatpush1.bf16.xpose.msra.mxu0 0
    %1256 = vmatprep.subr.bf16.mxu0 0
    %1257 = vmatpush1.bf16.xpose.msra.mxu0 0
    %1258 = vmatprep.subr.bf16.mxu0 0
    %1259 = vmatpush1.bf16.xpose.msra.mxu0 0
    %1260 = vmatprep.subr.bf16.mxu0 0
    %1261 = vmatpush1.bf16.xpose.msra.mxu0 0
    %1262 = vmatprep.subr.bf16.mxu0 0
    %1263 = vmatpush1.bf16.xpose.msra.mxu0 0
    %1264 = vmatprep.subr.bf16.mxu0 0
    %1265 = vmatpush1.bf16.xpose.msra.mxu0 0
    %1266 = vmatprep.subr.bf16.mxu0 0
    %1267 = vmatpush1.bf16.xpose.msra.mxu0 %v1250
    %1268 = vmatprep.subr.bf16.mxu0 0
    %1269 = vmatpush2.bf16.xpose.msra.mxu0 0
    %1270 = vmatprep.subr.bf16.mxu0 0
    %1271 = vmatpush2.bf16.xpose.msra.mxu0 0
    %1272 = vmatprep.subr.bf16.mxu0 0
    %1273 = vmatpush2.bf16.xpose.msra.mxu0 0
    %1274 = vmatprep.subr.bf16.mxu0 0
    %1275 = vmatpush2.bf16.xpose.msra.mxu0 0
    %1276 = vmatprep.subr.bf16.mxu0 0
    %1277 = vmatpush2.bf16.xpose.msra.mxu0 0
    %1278 = vmatprep.subr.bf16.mxu0 0
    %1279 = vmatpush2.bf16.xpose.msra.mxu0 0
    %1280 = vmatprep.subr.bf16.mxu0 0
    %1281 = vmatpush2.bf16.xpose.msra.mxu0 0
    %1282 = vmatprep.subr.bf16.mxu0 0
    %1283 = vmatpush2.bf16.xpose.msra.mxu0 0
    %1284 = vmatprep.mubr.bf16.mxu0 0
    %1285 = vmatmul.mubr.bf16.gmra.mxu0 %v1249
    %v1286 = vpop.f32.mrf.mxu0
    %v1287 = vadd.f32 0.0, %v1286
    %v1288 = vpop.f32.mrf.mxu0
    %v1289 = vpop.f32.mrf.mxu0
    %v1290 = vpop.f32.mrf.mxu0
    %1291 = vdwg.mxu0
    %v1292 = vmul.f32 %v1287, 0.35355338
    %v1293 = vadd.f32 %v1292, %v1126
    %v1294 = vsel %vm1172, %v1293, -inf
    %1295 = vmax.xlane.f32.xlu0 %v1294
    %v1296 = vpop.xlane.xlu0 %1295
    %v1297 = vsub.f32 %v1293, %v1296
    %v1298 = vmul.f32 %v1297, 1.442695
    %v1299 = vpow.pop %v1298
    %v1300 = vsel %vm1172, %v1299, 0.0
    %1301 = vadd.xlane.f32.xlu0 %v1300
    %v1302 = vpop.xlane.xlu0 %1301
    %v1303 = vrcp.pop %v1302
    %v1304 = vmul.f32 %v1299, %v1303
    %v1305 = vpack.c.bf16 %v1304, %v1304
    %v1307 = vsel %vm1172, %v1305, 0
    %v1310 = vsel %vm1188, %v1251, 0
    %1312 = vmatprep.subr.bf16.mxu0 0
    %1313 = vmatpush1.bf16.msra.mxu0 0
    %1314 = vmatprep.subr.bf16.mxu0 0
    %1315 = vmatpush1.bf16.msra.mxu0 0
    %1316 = vmatprep.subr.bf16.mxu0 0
    %1317 = vmatpush1.bf16.msra.mxu0 0
    %1318 = vmatprep.subr.bf16.mxu0 0
    %1319 = vmatpush1.bf16.msra.mxu0 0
    %1320 = vmatprep.subr.bf16.mxu0 0
    %1321 = vmatpush1.bf16.msra.mxu0 0
    %1322 = vmatprep.subr.bf16.mxu0 0
    %1323 = vmatpush1.bf16.msra.mxu0 0
    %1324 = vmatprep.subr.bf16.mxu0 0
    %1325 = vmatpush1.bf16.msra.mxu0 0
    %1326 = vmatprep.subr.bf16.mxu0 0
    %1327 = vmatpush1.bf16.msra.mxu0 %v1310
    %1328 = vmatprep.subr.bf16.mxu0 0
    %1329 = vmatpush2.bf16.msra.mxu0 0
    %1330 = vmatprep.subr.bf16.mxu0 0
    %1331 = vmatpush2.bf16.msra.mxu0 0
    %1332 = vmatprep.subr.bf16.mxu0 0
    %1333 = vmatpush2.bf16.msra.mxu0 0
    %1334 = vmatprep.subr.bf16.mxu0 0
    %1335 = vmatpush2.bf16.msra.mxu0 0
    %1336 = vmatprep.subr.bf16.mxu0 0
    %1337 = vmatpush2.bf16.msra.mxu0 0
    %1338 = vmatprep.subr.bf16.mxu0 0
    %1339 = vmatpush2.bf16.msra.mxu0 0
    %1340 = vmatprep.subr.bf16.mxu0 0
    %1341 = vmatpush2.bf16.msra.mxu0 0
    %1342 = vmatprep.subr.bf16.mxu0 0
    %1343 = vmatpush2.bf16.msra.mxu0 0
    %1344 = vmatprep.mubr.bf16.mxu0 0
    %1345 = vmatmul.mubr.bf16.gmra.mxu0 %v1307
    %v1346 = vpop.f32.mrf.mxu0
    %v1347 = vadd.f32 0.0, %v1346
    %v1348 = vpop.f32.mrf.mxu0
    %v1349 = vpop.f32.mrf.mxu0
    %v1350 = vpop.f32.mrf.mxu0
    %1351 = vdwg.mxu0
    %v1352 = vpack.c.bf16 %v1347, %v1347
    %s1353 = scalar_lea.vmem [#allocation12], 64
    %v1354 = vld [vmem:[%s1353] sm:$0xf]
    %v1355 = vld [vmem:[%s1353 + $0x4] sm:$0xf]
    %v1356 = vld [vmem:[%s1353 + $0x8] sm:$0xf]
    %v1357 = vld [vmem:[%s1353 + $0xc] sm:$0xf]
    %v1358 = vld [vmem:[%s1353 + $0x10] sm:$0xf]
    %v1359 = vld [vmem:[%s1353 + $0x14] sm:$0xf]
    %v1360 = vld [vmem:[%s1353 + $0x18] sm:$0xf]
    %v1361 = vld [vmem:[%s1353 + $0x1c] sm:$0xf]
    %v1362 = vld [vmem:[%s1353 + $0x20] sm:$0xf]
    %v1363 = vld [vmem:[%s1353 + $0x24] sm:$0xf]
    %v1364 = vld [vmem:[%s1353 + $0x28] sm:$0xf]
    %v1365 = vld [vmem:[%s1353 + $0x2c] sm:$0xf]
    %v1366 = vld [vmem:[%s1353 + $0x30] sm:$0xf]
    %v1367 = vld [vmem:[%s1353 + $0x34] sm:$0xf]
    %v1368 = vld [vmem:[%s1353 + $0x38] sm:$0xf]
    %v1369 = vld [vmem:[%s1353 + $0x3c] sm:$0xf]
    %v1386 = vunpack.c.l.b16 %v1354
    %v1387 = vunpack.c.l.b16 %v1355
    %v1388 = vunpack.c.l.b16 %v1356
    %v1389 = vunpack.c.l.b16 %v1357
    %v1390 = vunpack.c.l.b16 %v1358
    %v1391 = vunpack.c.l.b16 %v1359
    %v1392 = vunpack.c.l.b16 %v1360
    %v1393 = vunpack.c.l.b16 %v1361
    %v1394 = vunpack.c.l.b16 %v1362
    %v1395 = vunpack.c.l.b16 %v1363
    %v1396 = vunpack.c.l.b16 %v1364
    %v1397 = vunpack.c.l.b16 %v1365
    %v1398 = vunpack.c.l.b16 %v1366
    %v1399 = vunpack.c.l.b16 %v1367
    %v1400 = vunpack.c.l.b16 %v1368
    %v1401 = vunpack.c.l.b16 %v1369
    %v1402 = vpack.c.b16 %v1387, %v1386
    %v1403 = vpack.c.b16 %v1389, %v1388
    %v1404 = vpack.c.b16 %v1391, %v1390
    %v1405 = vpack.c.b16 %v1393, %v1392
    %v1406 = vpack.c.b16 %v1395, %v1394
    %v1407 = vpack.c.b16 %v1397, %v1396
    %v1408 = vpack.c.b16 %v1399, %v1398
    %v1409 = vpack.c.b16 %v1401, %v1400
    %1418 = vmatprep.subr.bf16.mxu0 0
    %1419 = vmatpush1.bf16.msra.mxu0 %v1409
    %1420 = vmatprep.subr.bf16.mxu0 0
    %1421 = vmatpush1.bf16.msra.mxu0 %v1408
    %1422 = vmatprep.subr.bf16.mxu0 0
    %1423 = vmatpush1.bf16.msra.mxu0 %v1407
    %1424 = vmatprep.subr.bf16.mxu0 0
    %1425 = vmatpush1.bf16.msra.mxu0 %v1406
    %1426 = vmatprep.subr.bf16.mxu0 0
    %1427 = vmatpush1.bf16.msra.mxu0 %v1405
    %1428 = vmatprep.subr.bf16.mxu0 0
    %1429 = vmatpush1.bf16.msra.mxu0 %v1404
    %1430 = vmatprep.subr.bf16.mxu0 0
    %1431 = vmatpush1.bf16.msra.mxu0 %v1403
    %1432 = vmatprep.subr.bf16.mxu0 0
    %1433 = vmatpush1.bf16.msra.mxu0 %v1402
    %1434 = vmatprep.subr.bf16.mxu0 0
    %1435 = vmatpush2.bf16.msra.mxu0 0
    %1436 = vmatprep.subr.bf16.mxu0 0
    %1437 = vmatpush2.bf16.msra.mxu0 0
    %1438 = vmatprep.subr.bf16.mxu0 0
    %1439 = vmatpush2.bf16.msra.mxu0 0
    %1440 = vmatprep.subr.bf16.mxu0 0
    %1441 = vmatpush2.bf16.msra.mxu0 0
    %1442 = vmatprep.subr.bf16.mxu0 0
    %1443 = vmatpush2.bf16.msra.mxu0 0
    %1444 = vmatprep.subr.bf16.mxu0 0
    %1445 = vmatpush2.bf16.msra.mxu0 0
    %1446 = vmatprep.subr.bf16.mxu0 0
    %1447 = vmatpush2.bf16.msra.mxu0 0
    %1448 = vmatprep.subr.bf16.mxu0 0
    %1449 = vmatpush2.bf16.msra.mxu0 0
    %1450 = vmatprep.mubr.bf16.mxu0 0
    %1451 = vmatmul.mubr.bf16.gmra.mxu0 %v1352
    %v1452 = vpop.f32.mrf.mxu0
    %v1453 = vadd.f32 0.0, %v1452
    %v1454 = vpop.f32.mrf.mxu0
    %v1455 = vpop.f32.mrf.mxu0
    %v1456 = vpop.f32.mrf.mxu0
    %1457 = vdwg.mxu0
    %v1474 = vunpack.c.l.b16 %v1233
    %v1475 = vunpack.c.l.b16 %v1234
    %v1476 = vunpack.c.l.b16 %v1235
    %v1477 = vunpack.c.l.b16 %v1236
    %v1478 = vunpack.c.l.b16 %v1237
    %v1479 = vunpack.c.l.b16 %v1238
    %v1480 = vunpack.c.l.b16 %v1239
    %v1481 = vunpack.c.l.b16 %v1240
    %v1482 = vunpack.c.l.b16 %v1241
    %v1483 = vunpack.c.l.b16 %v1242
    %v1484 = vunpack.c.l.b16 %v1243
    %v1485 = vunpack.c.l.b16 %v1244
    %v1486 = vunpack.c.l.b16 %v1245
    %v1487 = vunpack.c.l.b16 %v1246
    %v1488 = vunpack.c.l.b16 %v1247
    %v1489 = vunpack.c.l.b16 %v1248
    %v1490 = vpack.c.b16 %v1475, %v1474
    %v1491 = vpack.c.b16 %v1477, %v1476
    %v1492 = vpack.c.b16 %v1479, %v1478
    %v1493 = vpack.c.b16 %v1481, %v1480
    %v1494 = vpack.c.b16 %v1483, %v1482
    %v1495 = vpack.c.b16 %v1485, %v1484
    %v1496 = vpack.c.b16 %v1487, %v1486
    %v1497 = vpack.c.b16 %v1489, %v1488
    %1506 = vmatprep.subr.bf16.mxu0 0
    %1507 = vmatpush1.bf16.msra.mxu0 %v1497
    %1508 = vmatprep.subr.bf16.mxu0 0
    %1509 = vmatpush1.bf16.msra.mxu0 %v1496
    %1510 = vmatprep.subr.bf16.mxu0 0
    %1511 = vmatpush1.bf16.msra.mxu0 %v1495
    %1512 = vmatprep.subr.bf16.mxu0 0
    %1513 = vmatpush1.bf16.msra.mxu0 %v1494
    %1514 = vmatprep.subr.bf16.mxu0 0
    %1515 = vmatpush1.bf16.msra.mxu0 %v1493
    %1516 = vmatprep.subr.bf16.mxu0 0
    %1517 = vmatpush1.bf16.msra.mxu0 %v1492
    %1518 = vmatprep.subr.bf16.mxu0 0
    %1519 = vmatpush1.bf16.msra.mxu0 %v1491
    %1520 = vmatprep.subr.bf16.mxu0 0
    %1521 = vmatpush1.bf16.msra.mxu0 %v1490
    %1522 = vmatprep.subr.bf16.mxu0 0
    %1523 = vmatpush2.bf16.msra.mxu0 0
    %1524 = vmatprep.subr.bf16.mxu0 0
    %1525 = vmatpush2.bf16.msra.mxu0 0
    %1526 = vmatprep.subr.bf16.mxu0 0
    %1527 = vmatpush2.bf16.msra.mxu0 0
    %1528 = vmatprep.subr.bf16.mxu0 0
    %1529 = vmatpush2.bf16.msra.mxu0 0
    %1530 = vmatprep.subr.bf16.mxu0 0
    %1531 = vmatpush2.bf16.msra.mxu0 0
    %1532 = vmatprep.subr.bf16.mxu0 0
    %1533 = vmatpush2.bf16.msra.mxu0 0
    %1534 = vmatprep.subr.bf16.mxu0 0
    %1535 = vmatpush2.bf16.msra.mxu0 0
    %1536 = vmatprep.subr.bf16.mxu0 0
    %1537 = vmatpush2.bf16.msra.mxu0 0
    %1538 = vmatprep.mubr.bf16.mxu0 0
    %1539 = vmatmul.mubr.bf16.gmra.mxu0 %v1232
    %v1540 = vpop.f32.mrf.mxu0
    %v1541 = vadd.f32 %v1453, %v1540
    %v1542 = vpop.f32.mrf.mxu0
    %v1543 = vpop.f32.mrf.mxu0
    %v1544 = vpop.f32.mrf.mxu0
    %1545 = vdwg.mxu0
    %v1546 = vpack.c.bf16 %v951, %v951
    %v1547 = vpack.c.bf16 %v1033, %v1033
    %v1548 = vpack.c.bf16 %v1115, %v1115
    %1549 = vmatprep.subr.bf16.mxu0 0
    %1550 = vmatpush1.bf16.xpose.msra.mxu0 0
    %1551 = vmatprep.subr.bf16.mxu0 0
    %1552 = vmatpush1.bf16.xpose.msra.mxu0 0
    %1553 = vmatprep.subr.bf16.mxu0 0
    %1554 = vmatpush1.bf16.xpose.msra.mxu0 0
    %1555 = vmatprep.subr.bf16.mxu0 0
    %1556 = vmatpush1.bf16.xpose.msra.mxu0 0
    %1557 = vmatprep.subr.bf16.mxu0 0
    %1558 = vmatpush1.bf16.xpose.msra.mxu0 0
    %1559 = vmatprep.subr.bf16.mxu0 0
    %1560 = vmatpush1.bf16.xpose.msra.mxu0 0
    %1561 = vmatprep.subr.bf16.mxu0 0
    %1562 = vmatpush1.bf16.xpose.msra.mxu0 0
    %1563 = vmatprep.subr.bf16.mxu0 0
    %1564 = vmatpush1.bf16.xpose.msra.mxu0 %v1547
    %1565 = vmatprep.subr.bf16.mxu0 0
    %1566 = vmatpush2.bf16.xpose.msra.mxu0 0
    %1567 = vmatprep.subr.bf16.mxu0 0
    %1568 = vmatpush2.bf16.xpose.msra.mxu0 0
    %1569 = vmatprep.subr.bf16.mxu0 0
    %1570 = vmatpush2.bf16.xpose.msra.mxu0 0
    %1571 = vmatprep.subr.bf16.mxu0 0
    %1572 = vmatpush2.bf16.xpose.msra.mxu0 0
    %1573 = vmatprep.subr.bf16.mxu0 0
    %1574 = vmatpush2.bf16.xpose.msra.mxu0 0
    %1575 = vmatprep.subr.bf16.mxu0 0
    %1576 = vmatpush2.bf16.xpose.msra.mxu0 0
    %1577 = vmatprep.subr.bf16.mxu0 0
    %1578 = vmatpush2.bf16.xpose.msra.mxu0 0
    %1579 = vmatprep.subr.bf16.mxu0 0
    %1580 = vmatpush2.bf16.xpose.msra.mxu0 0
    %1581 = vmatprep.mubr.bf16.mxu0 0
    %1582 = vmatmul.mubr.bf16.gmra.mxu0 %v1546
    %v1583 = vpop.f32.mrf.mxu0
    %v1584 = vadd.f32 0.0, %v1583
    %v1585 = vpop.f32.mrf.mxu0
    %v1586 = vpop.f32.mrf.mxu0
    %v1587 = vpop.f32.mrf.mxu0
    %1588 = vdwg.mxu0
    %v1589 = vmul.f32 %v1584, 0.35355338
    %v1590 = vadd.f32 %v1589, %v1126
    %v1591 = vsel %vm1172, %v1590, -inf
    %1592 = vmax.xlane.f32.xlu0 %v1591
    %v1593 = vpop.xlane.xlu0 %1592
    %v1594 = vsub.f32 %v1590, %v1593
    %v1595 = vmul.f32 %v1594, 1.442695
    %v1596 = vpow.pop %v1595
    %v1597 = vsel %vm1172, %v1596, 0.0
    %1598 = vadd.xlane.f32.xlu0 %v1597
    %v1599 = vpop.xlane.xlu0 %1598
    %v1600 = vrcp.pop %v1599
    %v1601 = vmul.f32 %v1596, %v1600
    %v1602 = vpack.c.bf16 %v1601, %v1601
    %v1604 = vsel %vm1172, %v1602, 0
    %v1607 = vsel %vm1188, %v1548, 0
    %1609 = vmatprep.subr.bf16.mxu0 0
    %1610 = vmatpush1.bf16.msra.mxu0 0
    %1611 = vmatprep.subr.bf16.mxu0 0
    %1612 = vmatpush1.bf16.msra.mxu0 0
    %1613 = vmatprep.subr.bf16.mxu0 0
    %1614 = vmatpush1.bf16.msra.mxu0 0
    %1615 = vmatprep.subr.bf16.mxu0 0
    %1616 = vmatpush1.bf16.msra.mxu0 0
    %1617 = vmatprep.subr.bf16.mxu0 0
    %1618 = vmatpush1.bf16.msra.mxu0 0
    %1619 = vmatprep.subr.bf16.mxu0 0
    %1620 = vmatpush1.bf16.msra.mxu0 0
    %1621 = vmatprep.subr.bf16.mxu0 0
    %1622 = vmatpush1.bf16.msra.mxu0 0
    %1623 = vmatprep.subr.bf16.mxu0 0
    %1624 = vmatpush1.bf16.msra.mxu0 %v1607
    %1625 = vmatprep.subr.bf16.mxu0 0
    %1626 = vmatpush2.bf16.msra.mxu0 0
    %1627 = vmatprep.subr.bf16.mxu0 0
    %1628 = vmatpush2.bf16.msra.mxu0 0
    %1629 = vmatprep.subr.bf16.mxu0 0
    %1630 = vmatpush2.bf16.msra.mxu0 0
    %1631 = vmatprep.subr.bf16.mxu0 0
    %1632 = vmatpush2.bf16.msra.mxu0 0
    %1633 = vmatprep.subr.bf16.mxu0 0
    %1634 = vmatpush2.bf16.msra.mxu0 0
    %1635 = vmatprep.subr.bf16.mxu0 0
    %1636 = vmatpush2.bf16.msra.mxu0 0
    %1637 = vmatprep.subr.bf16.mxu0 0
    %1638 = vmatpush2.bf16.msra.mxu0 0
    %1639 = vmatprep.subr.bf16.mxu0 0
    %1640 = vmatpush2.bf16.msra.mxu0 0
    %1641 = vmatprep.mubr.bf16.mxu0 0
    %1642 = vmatmul.mubr.bf16.gmra.mxu0 %v1604
    %v1643 = vpop.f32.mrf.mxu0
    %v1644 = vadd.f32 0.0, %v1643
    %v1645 = vpop.f32.mrf.mxu0
    %v1646 = vpop.f32.mrf.mxu0
    %v1647 = vpop.f32.mrf.mxu0
    %1648 = vdwg.mxu0
    %v1649 = vpack.c.bf16 %v1644, %v1644
    %s1650 = scalar_lea.vmem [#allocation12], 128
    %v1651 = vld [vmem:[%s1650] sm:$0xf]
    %v1652 = vld [vmem:[%s1650 + $0x4] sm:$0xf]
    %v1653 = vld [vmem:[%s1650 + $0x8] sm:$0xf]
    %v1654 = vld [vmem:[%s1650 + $0xc] sm:$0xf]
    %v1655 = vld [vmem:[%s1650 + $0x10] sm:$0xf]
    %v1656 = vld [vmem:[%s1650 + $0x14] sm:$0xf]
    %v1657 = vld [vmem:[%s1650 + $0x18] sm:$0xf]
    %v1658 = vld [vmem:[%s1650 + $0x1c] sm:$0xf]
    %v1659 = vld [vmem:[%s1650 + $0x20] sm:$0xf]
    %v1660 = vld [vmem:[%s1650 + $0x24] sm:$0xf]
    %v1661 = vld [vmem:[%s1650 + $0x28] sm:$0xf]
    %v1662 = vld [vmem:[%s1650 + $0x2c] sm:$0xf]
    %v1663 = vld [vmem:[%s1650 + $0x30] sm:$0xf]
    %v1664 = vld [vmem:[%s1650 + $0x34] sm:$0xf]
    %v1665 = vld [vmem:[%s1650 + $0x38] sm:$0xf]
    %v1666 = vld [vmem:[%s1650 + $0x3c] sm:$0xf]
    %v1683 = vunpack.c.l.b16 %v1651
    %v1684 = vunpack.c.l.b16 %v1652
    %v1685 = vunpack.c.l.b16 %v1653
    %v1686 = vunpack.c.l.b16 %v1654
    %v1687 = vunpack.c.l.b16 %v1655
    %v1688 = vunpack.c.l.b16 %v1656
    %v1689 = vunpack.c.l.b16 %v1657
    %v1690 = vunpack.c.l.b16 %v1658
    %v1691 = vunpack.c.l.b16 %v1659
    %v1692 = vunpack.c.l.b16 %v1660
    %v1693 = vunpack.c.l.b16 %v1661
    %v1694 = vunpack.c.l.b16 %v1662
    %v1695 = vunpack.c.l.b16 %v1663
    %v1696 = vunpack.c.l.b16 %v1664
    %v1697 = vunpack.c.l.b16 %v1665
    %v1698 = vunpack.c.l.b16 %v1666
    %v1699 = vpack.c.b16 %v1684, %v1683
    %v1700 = vpack.c.b16 %v1686, %v1685
    %v1701 = vpack.c.b16 %v1688, %v1687
    %v1702 = vpack.c.b16 %v1690, %v1689
    %v1703 = vpack.c.b16 %v1692, %v1691
    %v1704 = vpack.c.b16 %v1694, %v1693
    %v1705 = vpack.c.b16 %v1696, %v1695
    %v1706 = vpack.c.b16 %v1698, %v1697
    %1715 = vmatprep.subr.bf16.mxu0 0
    %1716 = vmatpush1.bf16.msra.mxu0 %v1706
    %1717 = vmatprep.subr.bf16.mxu0 0
    %1718 = vmatpush1.bf16.msra.mxu0 %v1705
    %1719 = vmatprep.subr.bf16.mxu0 0
    %1720 = vmatpush1.bf16.msra.mxu0 %v1704
    %1721 = vmatprep.subr.bf16.mxu0 0
    %1722 = vmatpush1.bf16.msra.mxu0 %v1703
    %1723 = vmatprep.subr.bf16.mxu0 0
    %1724 = vmatpush1.bf16.msra.mxu0 %v1702
    %1725 = vmatprep.subr.bf16.mxu0 0
    %1726 = vmatpush1.bf16.msra.mxu0 %v1701
    %1727 = vmatprep.subr.bf16.mxu0 0
    %1728 = vmatpush1.bf16.msra.mxu0 %v1700
    %1729 = vmatprep.subr.bf16.mxu0 0
    %1730 = vmatpush1.bf16.msra.mxu0 %v1699
    %1731 = vmatprep.subr.bf16.mxu0 0
    %1732 = vmatpush2.bf16.msra.mxu0 0
    %1733 = vmatprep.subr.bf16.mxu0 0
    %1734 = vmatpush2.bf16.msra.mxu0 0
    %1735 = vmatprep.subr.bf16.mxu0 0
    %1736 = vmatpush2.bf16.msra.mxu0 0
    %1737 = vmatprep.subr.bf16.mxu0 0
    %1738 = vmatpush2.bf16.msra.mxu0 0
    %1739 = vmatprep.subr.bf16.mxu0 0
    %1740 = vmatpush2.bf16.msra.mxu0 0
    %1741 = vmatprep.subr.bf16.mxu0 0
    %1742 = vmatpush2.bf16.msra.mxu0 0
    %1743 = vmatprep.subr.bf16.mxu0 0
    %1744 = vmatpush2.bf16.msra.mxu0 0
    %1745 = vmatprep.subr.bf16.mxu0 0
    %1746 = vmatpush2.bf16.msra.mxu0 0
    %1747 = vmatprep.mubr.bf16.mxu0 0
    %1748 = vmatmul.mubr.bf16.gmra.mxu0 %v1649
    %v1749 = vpop.f32.mrf.mxu0
    %v1750 = vadd.f32 0.0, %v1749
    %v1751 = vpop.f32.mrf.mxu0
    %v1752 = vpop.f32.mrf.mxu0
    %v1753 = vpop.f32.mrf.mxu0
    %1754 = vdwg.mxu0
    %v1755 = vadd.f32 %v1541, %v1750
    %v1756 = vpack.c.bf16 %v953, %v953
    %v1757 = vpack.c.bf16 %v1035, %v1035
    %v1758 = vpack.c.bf16 %v1117, %v1117
    %1759 = vmatprep.subr.bf16.mxu0 0
    %1760 = vmatpush1.bf16.xpose.msra.mxu0 0
    %1761 = vmatprep.subr.bf16.mxu0 0
    %1762 = vmatpush1.bf16.xpose.msra.mxu0 0
    %1763 = vmatprep.subr.bf16.mxu0 0
    %1764 = vmatpush1.bf16.xpose.msra.mxu0 0
    %1765 = vmatprep.subr.bf16.mxu0 0
    %1766 = vmatpush1.bf16.xpose.msra.mxu0 0
    %1767 = vmatprep.subr.bf16.mxu0 0
    %1768 = vmatpush1.bf16.xpose.msra.mxu0 0
    %1769 = vmatprep.subr.bf16.mxu0 0
    %1770 = vmatpush1.bf16.xpose.msra.mxu0 0
    %1771 = vmatprep.subr.bf16.mxu0 0
    %1772 = vmatpush1.bf16.xpose.msra.mxu0 0
    %1773 = vmatprep.subr.bf16.mxu0 0
    %1774 = vmatpush1.bf16.xpose.msra.mxu0 %v1757
    %1775 = vmatprep.subr.bf16.mxu0 0
    %1776 = vmatpush2.bf16.xpose.msra.mxu0 0
    %1777 = vmatprep.subr.bf16.mxu0 0
    %1778 = vmatpush2.bf16.xpose.msra.mxu0 0
    %1779 = vmatprep.subr.bf16.mxu0 0
    %1780 = vmatpush2.bf16.xpose.msra.mxu0 0
    %1781 = vmatprep.subr.bf16.mxu0 0
    %1782 = vmatpush2.bf16.xpose.msra.mxu0 0
    %1783 = vmatprep.subr.bf16.mxu0 0
    %1784 = vmatpush2.bf16.xpose.msra.mxu0 0
    %1785 = vmatprep.subr.bf16.mxu0 0
    %1786 = vmatpush2.bf16.xpose.msra.mxu0 0
    %1787 = vmatprep.subr.bf16.mxu0 0
    %1788 = vmatpush2.bf16.xpose.msra.mxu0 0
    %1789 = vmatprep.subr.bf16.mxu0 0
    %1790 = vmatpush2.bf16.xpose.msra.mxu0 0
    %1791 = vmatprep.mubr.bf16.mxu0 0
    %1792 = vmatmul.mubr.bf16.gmra.mxu0 %v1756
    %v1793 = vpop.f32.mrf.mxu0
    %v1794 = vadd.f32 0.0, %v1793
    %v1795 = vpop.f32.mrf.mxu0
    %v1796 = vpop.f32.mrf.mxu0
    %v1797 = vpop.f32.mrf.mxu0
    %1798 = vdwg.mxu0
    %v1799 = vmul.f32 %v1794, 0.35355338
    %v1800 = vadd.f32 %v1799, %v1126
    %v1801 = vsel %vm1172, %v1800, -inf
    %1802 = vmax.xlane.f32.xlu0 %v1801
    %v1803 = vpop.xlane.xlu0 %1802
    %v1804 = vsub.f32 %v1800, %v1803
    %v1805 = vmul.f32 %v1804, 1.442695
    %v1806 = vpow.pop %v1805
    %v1807 = vsel %vm1172, %v1806, 0.0
    %1808 = vadd.xlane.f32.xlu0 %v1807
    %v1809 = vpop.xlane.xlu0 %1808
    %v1810 = vrcp.pop %v1809
    %v1811 = vmul.f32 %v1806, %v1810
    %v1812 = vpack.c.bf16 %v1811, %v1811
    %v1814 = vsel %vm1172, %v1812, 0
    %v1817 = vsel %vm1188, %v1758, 0
    %1819 = vmatprep.subr.bf16.mxu0 0
    %1820 = vmatpush1.bf16.msra.mxu0 0
    %1821 = vmatprep.subr.bf16.mxu0 0
    %1822 = vmatpush1.bf16.msra.mxu0 0
    %1823 = vmatprep.subr.bf16.mxu0 0
    %1824 = vmatpush1.bf16.msra.mxu0 0
    %1825 = vmatprep.subr.bf16.mxu0 0
    %1826 = vmatpush1.bf16.msra.mxu0 0
    %1827 = vmatprep.subr.bf16.mxu0 0
    %1828 = vmatpush1.bf16.msra.mxu0 0
    %1829 = vmatprep.subr.bf16.mxu0 0
    %1830 = vmatpush1.bf16.msra.mxu0 0
    %1831 = vmatprep.subr.bf16.mxu0 0
    %1832 = vmatpush1.bf16.msra.mxu0 0
    %1833 = vmatprep.subr.bf16.mxu0 0
    %1834 = vmatpush1.bf16.msra.mxu0 %v1817
    %1835 = vmatprep.subr.bf16.mxu0 0
    %1836 = vmatpush2.bf16.msra.mxu0 0
    %1837 = vmatprep.subr.bf16.mxu0 0
    %1838 = vmatpush2.bf16.msra.mxu0 0
    %1839 = vmatprep.subr.bf16.mxu0 0
    %1840 = vmatpush2.bf16.msra.mxu0 0
    %1841 = vmatprep.subr.bf16.mxu0 0
    %1842 = vmatpush2.bf16.msra.mxu0 0
    %1843 = vmatprep.subr.bf16.mxu0 0
    %1844 = vmatpush2.bf16.msra.mxu0 0
    %1845 = vmatprep.subr.bf16.mxu0 0
    %1846 = vmatpush2.bf16.msra.mxu0 0
    %1847 = vmatprep.subr.bf16.mxu0 0
    %1848 = vmatpush2.bf16.msra.mxu0 0
    %1849 = vmatprep.subr.bf16.mxu0 0
    %1850 = vmatpush2.bf16.msra.mxu0 0
    %1851 = vmatprep.mubr.bf16.mxu0 0
    %1852 = vmatmul.mubr.bf16.gmra.mxu0 %v1814
    %v1853 = vpop.f32.mrf.mxu0
    %v1854 = vadd.f32 0.0, %v1853
    %v1855 = vpop.f32.mrf.mxu0
    %v1856 = vpop.f32.mrf.mxu0
    %v1857 = vpop.f32.mrf.mxu0
    %1858 = vdwg.mxu0
    %v1859 = vpack.c.bf16 %v1854, %v1854
    %s1860 = scalar_lea.vmem [#allocation12], 192
    %v1861 = vld [vmem:[%s1860] sm:$0xf]
    %v1862 = vld [vmem:[%s1860 + $0x4] sm:$0xf]
    %v1863 = vld [vmem:[%s1860 + $0x8] sm:$0xf]
    %v1864 = vld [vmem:[%s1860 + $0xc] sm:$0xf]
    %v1865 = vld [vmem:[%s1860 + $0x10] sm:$0xf]
    %v1866 = vld [vmem:[%s1860 + $0x14] sm:$0xf]
    %v1867 = vld [vmem:[%s1860 + $0x18] sm:$0xf]
    %v1868 = vld [vmem:[%s1860 + $0x1c] sm:$0xf]
    %v1869 = vld [vmem:[%s1860 + $0x20] sm:$0xf]
    %v1870 = vld [vmem:[%s1860 + $0x24] sm:$0xf]
    %v1871 = vld [vmem:[%s1860 + $0x28] sm:$0xf]
    %v1872 = vld [vmem:[%s1860 + $0x2c] sm:$0xf]
    %v1873 = vld [vmem:[%s1860 + $0x30] sm:$0xf]
    %v1874 = vld [vmem:[%s1860 + $0x34] sm:$0xf]
    %v1875 = vld [vmem:[%s1860 + $0x38] sm:$0xf]
    %v1876 = vld [vmem:[%s1860 + $0x3c] sm:$0xf]
    %v1893 = vunpack.c.l.b16 %v1861
    %v1894 = vunpack.c.l.b16 %v1862
    %v1895 = vunpack.c.l.b16 %v1863
    %v1896 = vunpack.c.l.b16 %v1864
    %v1897 = vunpack.c.l.b16 %v1865
    %v1898 = vunpack.c.l.b16 %v1866
    %v1899 = vunpack.c.l.b16 %v1867
    %v1900 = vunpack.c.l.b16 %v1868
    %v1901 = vunpack.c.l.b16 %v1869
    %v1902 = vunpack.c.l.b16 %v1870
    %v1903 = vunpack.c.l.b16 %v1871
    %v1904 = vunpack.c.l.b16 %v1872
    %v1905 = vunpack.c.l.b16 %v1873
    %v1906 = vunpack.c.l.b16 %v1874
    %v1907 = vunpack.c.l.b16 %v1875
    %v1908 = vunpack.c.l.b16 %v1876
    %v1909 = vpack.c.b16 %v1894, %v1893
    %v1910 = vpack.c.b16 %v1896, %v1895
    %v1911 = vpack.c.b16 %v1898, %v1897
    %v1912 = vpack.c.b16 %v1900, %v1899
    %v1913 = vpack.c.b16 %v1902, %v1901
    %v1914 = vpack.c.b16 %v1904, %v1903
    %v1915 = vpack.c.b16 %v1906, %v1905
    %v1916 = vpack.c.b16 %v1908, %v1907
    %1925 = vmatprep.subr.bf16.mxu0 0
    %1926 = vmatpush1.bf16.msra.mxu0 %v1916
    %1927 = vmatprep.subr.bf16.mxu0 0
    %1928 = vmatpush1.bf16.msra.mxu0 %v1915
    %1929 = vmatprep.subr.bf16.mxu0 0
    %1930 = vmatpush1.bf16.msra.mxu0 %v1914
    %1931 = vmatprep.subr.bf16.mxu0 0
    %1932 = vmatpush1.bf16.msra.mxu0 %v1913
    %1933 = vmatprep.subr.bf16.mxu0 0
    %1934 = vmatpush1.bf16.msra.mxu0 %v1912
    %1935 = vmatprep.subr.bf16.mxu0 0
    %1936 = vmatpush1.bf16.msra.mxu0 %v1911
    %1937 = vmatprep.subr.bf16.mxu0 0
    %1938 = vmatpush1.bf16.msra.mxu0 %v1910
    %1939 = vmatprep.subr.bf16.mxu0 0
    %1940 = vmatpush1.bf16.msra.mxu0 %v1909
    %1941 = vmatprep.subr.bf16.mxu0 0
    %1942 = vmatpush2.bf16.msra.mxu0 0
    %1943 = vmatprep.subr.bf16.mxu0 0
    %1944 = vmatpush2.bf16.msra.mxu0 0
    %1945 = vmatprep.subr.bf16.mxu0 0
    %1946 = vmatpush2.bf16.msra.mxu0 0
    %1947 = vmatprep.subr.bf16.mxu0 0
    %1948 = vmatpush2.bf16.msra.mxu0 0
    %1949 = vmatprep.subr.bf16.mxu0 0
    %1950 = vmatpush2.bf16.msra.mxu0 0
    %1951 = vmatprep.subr.bf16.mxu0 0
    %1952 = vmatpush2.bf16.msra.mxu0 0
    %1953 = vmatprep.subr.bf16.mxu0 0
    %1954 = vmatpush2.bf16.msra.mxu0 0
    %1955 = vmatprep.subr.bf16.mxu0 0
    %1956 = vmatpush2.bf16.msra.mxu0 0
    %1957 = vmatprep.mubr.bf16.mxu0 0
    %1958 = vmatmul.mubr.bf16.gmra.mxu0 %v1859
    %v1959 = vpop.f32.mrf.mxu0
    %v1960 = vadd.f32 0.0, %v1959
    %v1961 = vpop.f32.mrf.mxu0
    %v1962 = vpop.f32.mrf.mxu0
    %v1963 = vpop.f32.mrf.mxu0
    %1964 = vdwg.mxu0
    %v1965 = vadd.f32 %v1755, %v1960
    %v1966 = vld [vmem:[%s6] sm:$0x1]
    %v1968 = vlaneseq
    %v1969 = vshrl.u32 %v1968, 7
    %v1970 = vsub.s32 0, %v1969
    %v1971 = vrot.slane %v1966, %v1970
    %v1973 = vadd.f32 %v1965, %v1971
    %1974 = vst [vmem:[#allocation14] sm:$0xff] %v1973
    // Predicated region
    $region78: #{tpu_custom_call.1} parent=1 // pred_check
      _
    $region79: #{tpu_custom_call.1} parent=1 // pred_check_branch
      %1976 = sbr.rel (0) target = $region81
    $region80: #{tpu_custom_call.1} parent=1 // pred_region
      %s1978 = ssub.s32 128, 128
      %1979 = vsyncadd [#allocation6], %s1978
      %s1981 = sshll.u32 [#allocation14], 4
      %s1982 = int_to_ptr.vmem [resolvable:$true] %s1981
      %1984 = dma.vmem_to_hbm [thread:$0]  %s1982, 128, %s7, [#allocation6]
    $region81: #{tpu_custom_call.1} parent=1 // pred_fallthru
      _
    // Predicated region
    $region82: #{tpu_custom_call.1} parent=1 // pred_check
      _
    $region83: #{tpu_custom_call.1} parent=1 // pred_check_branch
      %1986 = sbr.rel (0) target = $region85
    $region84: #{tpu_custom_call.1} parent=1 // pred_region
      %1987 = dma.done [#allocation6], 128
    $region85: #{tpu_custom_call.1} parent=1 // pred_fallthru
      _
    %1988 = vsyncpa [#allocation5], 1
    %1989 = vsyncpa [#allocation10], 1
    %1990 = vsyncpa [#allocation13], 1
    %1991 = vsyncpa [#allocation6], 1
    %1992 = vsyncpa [#allocation7], 1
  %1993 = vsyncmov [#allocation3]
  %s1994 = vpop.sfrf %1993
  %p1995 = scmp.eq.s32.totalorder %s1994, 0
  %p1996 = pneg %p1995
  %1998 = shalt.err (%p1996)
  %s1999 = scalar_lea.sflag [#allocation3], 1
  %2000 = vsyncmov %s1999
  %s2001 = vpop.sfrf %2000
  %p2002 = scmp.eq.s32.totalorder %s2001, 0
  %p2003 = pneg %p2002
  %2005 = shalt.err (%p2003)
  %s2006 = scalar_lea.sflag [#allocation3], 2
  %2007 = vsyncmov %s2006
  %s2008 = vpop.sfrf %2007
  %p2009 = scmp.eq.s32.totalorder %s2008, 0
  %p2010 = pneg %p2009
  %2012 = shalt.err (%p2010)
  %s2013 = scalar_lea.sflag [#allocation3], 3
  %2014 = vsyncmov %s2013
  %s2015 = vpop.sfrf %2014
  %p2016 = scmp.eq.s32.totalorder %s2015, 0
  %p2017 = pneg %p2016
  %2019 = shalt.err (%p2017)
  %s2020 = scalar_lea.sflag [#allocation3], 4
  %2021 = vsyncmov %s2020
  %s2022 = vpop.sfrf %2021
  %p2023 = scmp.eq.s32.totalorder %s2022, 0
  %p2024 = pneg %p2023
  %2026 = shalt.err (%p2024)
  %s2027 = scalar_lea.sflag [#allocation3], 5
  %2028 = vsyncmov %s2027
  %s2029 = vpop.sfrf %2028
  %p2030 = scmp.eq.s32.totalorder %s2029, 0
  %p2031 = pneg %p2030
  %2033 = shalt.err (%p2031)
  %s2034 = scalar_lea.sflag [#allocation3], 6
  %2035 = vsyncmov %s2034
  %s2036 = vpop.sfrf %2035
  %p2037 = scmp.eq.s32.totalorder %s2036, 0
  %p2038 = pneg %p2037
  %2040 = shalt.err (%p2038)
  %s2041 = scalar_lea.sflag [#allocation3], 7
  %2042 = vsyncmov %s2041
  %s2043 = vpop.sfrf %2042
  %p2044 = scmp.eq.s32.totalorder %s2043, 0
  %p2045 = pneg %p2044
  %2047 = shalt.err (%p2045)

</llo_original>
